<compile_context>
chip_gen: v7x
topology: tpu7x:2x2x1
jax: 0.10.0
libtpu: 0.0.40
codegen_flags: <defaults>
</compile_context>

<pallas_src>
import functools

import jax
import jax.numpy as jnp
from jax.experimental import pallas as pl
from jax.experimental.pallas import tpu as pltpu

_COMPUTE_DTYPE = jnp.bfloat16
_LANE = 128
_POOLED_FEAT = 768
_MAX_TILE_N = 2048


def _round_up(x, m):
    return (x + m - 1) // m * m


def _elu(v):
    # ELU(alpha=1) in f32.  exp(min(v, 0)) keeps the inactive branch bounded.
    return jnp.where(v > 0.0, v, jnp.exp(jnp.minimum(v, 0.0)) - 1.0)


# ----------------------------- kernel ----------------------------------------

def ae_classifier_kernel(x_ref,
                         w1_ref, b1_ref,   # fc1:    768 -> 128
                         w2_ref, b2_ref,   # fc2:    128 -> 64
                         wa_ref, ba_ref,   # fc_1:   repr_dim(64) -> 32
                         wb_ref, bb_ref,   # fc_2:   32 -> 32
                         wc_ref, bc_ref,   # fc_3:   32 -> 32
                         wl_ref, bl_ref,   # fc_last (lane-padded): 32 -> 128
                         out_ref):
    cdt = _COMPUTE_DTYPE

    x = x_ref[...]                                                    # (T, 768) bf16
    h1 = _elu(jnp.dot(x, w1_ref[...],
                      preferred_element_type=jnp.float32) + b1_ref[...])      # (T, 128)
    enc = _elu(jnp.dot(h1.astype(cdt), w2_ref[...],
                       preferred_element_type=jnp.float32) + b2_ref[...])     # (T, 64)

    # classifier head with skip (z1 + z3)
    z1 = _elu(jnp.dot(enc.astype(cdt), wa_ref[...],
                      preferred_element_type=jnp.float32) + ba_ref[...])      # (T, 32)
    z2 = _elu(jnp.dot(z1.astype(cdt), wb_ref[...],
                      preferred_element_type=jnp.float32) + bb_ref[...])      # (T, 32)
    z3 = _elu(jnp.dot(z2.astype(cdt), wc_ref[...],
                      preferred_element_type=jnp.float32) + bc_ref[...])      # (T, 32)
    z = _elu(jnp.dot((z1 + z3).astype(cdt), wl_ref[...],
                     preferred_element_type=jnp.float32) + bl_ref[...])       # (T, 128)

    out_ref[...] = z.astype(out_ref.dtype)


# ----------------------------- wrapper ----------------------------------------

def _prepare_params(params):
    """Cast weights to bf16, keep biases f32, lane-pad fc_last to 128 lanes."""
    def w(name):
        return params[name].astype(_COMPUTE_DTYPE)

    def b(name):
        return params[name].astype(jnp.float32).reshape(1, -1)

    d_in_last, d_out = params["wl"].shape
    d_out_pad = _round_up(max(d_out, _LANE), _LANE)
    wl_pad = jnp.zeros((d_in_last, d_out_pad), _COMPUTE_DTYPE)
    wl_pad = wl_pad.at[:, :d_out].set(w("wl"))
    bl_pad = jnp.zeros((1, d_out_pad), jnp.float32)
    bl_pad = bl_pad.at[:, :d_out].set(b("bl"))

    flat = [w("w1"), b("b1"), w("w2"), b("b2"), w("wa"), b("ba"),
            w("wb"), b("bb"), w("wc"), b("bc"), wl_pad, bl_pad]
    return flat, d_out, d_out_pad


def _pick_tile_n(N):
    if N <= 16:
        # A single block equal to the full batch dim (always a legal block).
        return max(N, 1)
    # >= 2 grid steps so the "parallel" batch axis can be split across the two
    # v7x TensorCores; cap at _MAX_TILE_N to amortize per-step overhead on
    # v5e/v6e while keeping double-buffered tiles tiny vs VMEM.
    return min(_MAX_TILE_N, _round_up(pl.cdiv(N, 2), 16))


@functools.partial(jax.jit, static_argnames=("tile_n",))
def autoencoder_classifier(x, params, tile_n=None):
    N, C, H, W = x.shape
    H2, W2 = H // 2, W // 2
    assert C * H2 * W2 == _POOLED_FEAT, "pooled feature size must be 768"

    flat_params, d_out, d_out_pad = _prepare_params(params)

    if tile_n is None:
        tile_n = _pick_tile_n(N)

    # Single pass over x outside the kernel: AvgPool2d(2,2) + flatten + bf16
    # cast, fused by XLA.  No batch padding; the grid uses cdiv and Pallas
    # masks the partial final block.
    xp = (x.astype(jnp.float32)
            .reshape(N, C, H2, 2, W2, 2)
            .mean(axis=(3, 5))
            .reshape(N, _POOLED_FEAT)
            .astype(_COMPUTE_DTYPE))

    grid = (pl.cdiv(N, tile_n),)

    x_spec = pl.BlockSpec((tile_n, _POOLED_FEAT), lambda i: (i, 0))
    # Constant index_map => weights/biases are fetched once and stay resident.
    p_specs = [pl.BlockSpec(p.shape, lambda i: (0, 0)) for p in flat_params]
    out_spec = pl.BlockSpec((tile_n, d_out_pad), lambda i: (i, 0))

    weight_mats = flat_params[0::2]
    rows = grid[0] * tile_n
    flops = 2 * rows * sum(wm.shape[0] * wm.shape[1] for wm in weight_mats)
    transcendentals = rows * sum(wm.shape[1] for wm in weight_mats)
    bytes_accessed = (xp.size * xp.dtype.itemsize
                      + sum(p.size * p.dtype.itemsize for p in flat_params)
                      + N * d_out_pad * 2)

    out = pl.pallas_call(
        ae_classifier_kernel,
        out_shape=jax.ShapeDtypeStruct((N, d_out_pad), _COMPUTE_DTYPE),
        grid=grid,
        in_specs=[x_spec] + p_specs,
        out_specs=out_spec,
        compiler_params=pltpu.CompilerParams(
            dimension_semantics=("parallel",),
            vmem_limit_bytes=32 * 1024 * 1024,
        ),
        cost_estimate=pl.CostEstimate(
            flops=flops,
            transcendentals=transcendentals,
            bytes_accessed=bytes_accessed),
    )(xp, *flat_params)

    return out[:, :d_out].astype(jnp.float32)


# ----------------------------- params / reference -----------------------------

def init_params(key, repr_dim=64, d_out=10, n_neurons=32):
    """PyTorch-default-style init: U(-1/sqrt(fan_in), 1/sqrt(fan_in))."""
    def linear(k, fan_in, fan_out):
        kw, kb = jax.random.split(k)
        bound = 1.0 / float(jnp.sqrt(jnp.float32(fan_in)))
        wgt = jax.random.uniform(kw, (fan_in, fan_out), jnp.float32, -bound, bound)
        bia = jax.random.uniform(kb, (1, fan_out), jnp.float32, -bound, bound)
        return wgt, bia

    keys = jax.random.split(key, 6)
    p = {}
    p["w1"], p["b1"] = linear(keys[0], 768, 128)
    p["w2"], p["b2"] = linear(keys[1], 128, 64)
    p["wa"], p["ba"] = linear(keys[2], repr_dim, n_neurons)
    p["wb"], p["bb"] = linear(keys[3], n_neurons, n_neurons)
    p["wc"], p["bc"] = linear(keys[4], n_neurons, n_neurons)
    p["wl"], p["bl"] = linear(keys[5], n_neurons, d_out)
    return p


def reference(x, params, *, match_kernel_rounding=False):
    """Pure-JAX mirror of the PyTorch forward at bf16-rounded weights.
    With match_kernel_rounding=True the pooled input, inter-layer activations
    and the final output are also rounded to bf16 like the kernel does."""
    N, C, H, W = x.shape
    rd = lambda a: a.astype(jnp.bfloat16).astype(jnp.float32)
    act = rd if match_kernel_rounding else (lambda a: a)
    b = lambda n: params[n].astype(jnp.float32).reshape(1, -1)
    w = lambda n: rd(params[n])   # kernel always consumes bf16 weights

    with jax.default_matmul_precision("highest"):
        pooled = (x.astype(jnp.float32)
                    .reshape(N, C, H // 2, 2, W // 2, 2).mean(axis=(3, 5))
                    .reshape(N, _POOLED_FEAT))
        h1 = _elu(act(pooled) @ w("w1") + b("b1"))
        enc = _elu(act(h1) @ w("w2") + b("b2"))
        z1 = _elu(act(enc) @ w("wa") + b("ba"))
        z2 = _elu(act(z1) @ w("wb") + b("bb"))
        z3 = _elu(act(z2) @ w("wc") + b("bc"))
        out = _elu(act(z1 + z3) @ w("wl") + b("bl"))
        return act(out)   # kernel stores a bf16 output


# ----------------------------- main -------------------------------------------

if __name__ == "__main__":
    key = jax.random.PRNGKey(0)
    kx, kp = jax.random.split(key)

    # C=3, H=W=32 -> AvgPool2d(2,2) -> (3,16,16) -> 768 pooled features.
    N, C, H, W = 32, 3, 32, 32
    repr_dim, d_out, n_neurons = 64, 10, 32

    x = jax.random.normal(kx, (N, C, H, W), dtype=jnp.float32)
    params = init_params(kp, repr_dim=repr_dim, d_out=d_out, n_neurons=n_neurons)

    # Default tiling: tile_n=16 -> grid=(2,), both steps full (the "parallel"
    # batch axis can be split across the two v7x TensorCores).
    out = jax.block_until_ready(autoencoder_classifier(x, params))
    assert out.shape == (N, d_out), out.shape

    ref_tight = reference(x, params, match_kernel_rounding=True)
    ref_f32 = reference(x, params, match_kernel_rounding=False)
    assert jnp.allclose(out, ref_tight, atol=1.5e-2, rtol=1.5e-2), (
        "tight mismatch, max abs err = %g"
        % float(jnp.max(jnp.abs(out - ref_tight))))
    assert jnp.allclose(out, ref_f32, atol=6e-2, rtol=6e-2), (
        "f32 sanity mismatch, max abs err = %g"
        % float(jnp.max(jnp.abs(out - ref_f32))))

    # Ragged batch: N=21 -> tile_n=16, grid=(2,), partial final block (no pad).
    out_ragged = jax.block_until_ready(autoencoder_classifier(x[:21], params))
    assert out_ragged.shape == (21, d_out), out_ragged.shape
    assert jnp.allclose(out_ragged, out[:21], atol=1e-5, rtol=1e-5)

    # Tiny batch: N=5 -> a single full-array block.
    out_small = jax.block_until_ready(autoencoder_classifier(x[:5], params))
    assert out_small.shape == (5, d_out), out_small.shape
    assert jnp.allclose(out_small, out[:5], atol=1e-5, rtol=1e-5)

    print("KERNEL_OK")
</pallas_src>

<mosaic_0001>
module attributes {stable_mosaic.version = 11 : i64} {
  func.func @ae_classifier_kernel(%arg0: i32, %arg1: memref<16x768xbf16, #tpu.memory_space<vmem>>, %arg2: memref<768x128xbf16, #tpu.memory_space<vmem>>, %arg3: memref<1x128xf32, #tpu.memory_space<vmem>>, %arg4: memref<128x64xbf16, #tpu.memory_space<vmem>>, %arg5: memref<1x64xf32, #tpu.memory_space<vmem>>, %arg6: memref<64x32xbf16, #tpu.memory_space<vmem>>, %arg7: memref<1x32xf32, #tpu.memory_space<vmem>>, %arg8: memref<32x32xbf16, #tpu.memory_space<vmem>>, %arg9: memref<1x32xf32, #tpu.memory_space<vmem>>, %arg10: memref<32x32xbf16, #tpu.memory_space<vmem>>, %arg11: memref<1x32xf32, #tpu.memory_space<vmem>>, %arg12: memref<32x128xbf16, #tpu.memory_space<vmem>>, %arg13: memref<1x128xf32, #tpu.memory_space<vmem>>, %arg14: memref<16x128xbf16, #tpu.memory_space<vmem>>) attributes {dimension_semantics = [#tpu.dimension_semantics<parallel>], iteration_bounds = array<i64: 2>, scalar_prefetch = 0 : i64, scratch_operands = 0 : i64, tpu.core_type = #tpu.core_type<tc>, window_params = [{transform_indices = @transform_0, window_bounds = array<i64: 16, 768>}, {pipeline_mode = #tpu.pipeline_mode<synchronous>, transform_indices = @transform_1, window_bounds = array<i64: 768, 128>}, {pipeline_mode = #tpu.pipeline_mode<synchronous>, transform_indices = @transform_2, window_bounds = array<i64: 1, 128>}, {pipeline_mode = #tpu.pipeline_mode<synchronous>, transform_indices = @transform_3, window_bounds = array<i64: 128, 64>}, {pipeline_mode = #tpu.pipeline_mode<synchronous>, transform_indices = @transform_4, window_bounds = array<i64: 1, 64>}, {pipeline_mode = #tpu.pipeline_mode<synchronous>, transform_indices = @transform_5, window_bounds = array<i64: 64, 32>}, {pipeline_mode = #tpu.pipeline_mode<synchronous>, transform_indices = @transform_6, window_bounds = array<i64: 1, 32>}, {pipeline_mode = #tpu.pipeline_mode<synchronous>, transform_indices = @transform_7, window_bounds = array<i64: 32, 32>}, {pipeline_mode = #tpu.pipeline_mode<synchronous>, transform_indices = @transform_8, window_bounds = array<i64: 1, 32>}, {pipeline_mode = #tpu.pipeline_mode<synchronous>, transform_indices = @transform_9, window_bounds = array<i64: 32, 32>}, {pipeline_mode = #tpu.pipeline_mode<synchronous>, transform_indices = @transform_10, window_bounds = array<i64: 1, 32>}, {pipeline_mode = #tpu.pipeline_mode<synchronous>, transform_indices = @transform_11, window_bounds = array<i64: 32, 128>}, {pipeline_mode = #tpu.pipeline_mode<synchronous>, transform_indices = @transform_12, window_bounds = array<i64: 1, 128>}, {transform_indices = @transform_13, window_bounds = array<i64: 16, 128>}]} {
    %c0 = arith.constant 0 : index
    %c0_0 = arith.constant 0 : index
    %0 = vector.load %arg1[%c0, %c0_0] : memref<16x768xbf16, #tpu.memory_space<vmem>>, vector<16x768xbf16>
    %c0_1 = arith.constant 0 : index
    %c0_2 = arith.constant 0 : index
    %1 = vector.load %arg2[%c0_1, %c0_2] : memref<768x128xbf16, #tpu.memory_space<vmem>>, vector<768x128xbf16>
    %cst = arith.constant dense<0.000000e+00> : vector<16x128xf32>
    %2 = tpu.matmul %0, %1, %cst {dimension_numbers = #tpu.dot_dimension_numbers<[1], [0], [0], [1], [0, 0, 1, 1], [], []>} : vector<16x768xbf16>, vector<768x128xbf16>, vector<16x128xf32> -> vector<16x128xf32>
    %c0_3 = arith.constant 0 : index
    %c0_4 = arith.constant 0 : index
    %3 = vector.load %arg3[%c0_3, %c0_4] : memref<1x128xf32, #tpu.memory_space<vmem>>, vector<1x128xf32>
    %4 = vector.broadcast %3 : vector<1x128xf32> to vector<16x128xf32>
    %5 = arith.addf %2, %4 : vector<16x128xf32>
    %cst_5 = arith.constant 0.000000e+00 : f32
    %6 = vector.broadcast %cst_5 : f32 to vector<16x128xf32>
    %7 = arith.cmpf ogt, %5, %6 : vector<16x128xf32>
    %cst_6 = arith.constant 0.000000e+00 : f32
    %8 = vector.broadcast %cst_6 : f32 to vector<16x128xf32>
    %9 = arith.minimumf %5, %8 : vector<16x128xf32>
    %10 = math.exp %9 : vector<16x128xf32>
    %cst_7 = arith.constant 1.000000e+00 : f32
    %11 = vector.broadcast %cst_7 : f32 to vector<16x128xf32>
    %12 = arith.subf %10, %11 : vector<16x128xf32>
    %13 = arith.select %7, %5, %12 : vector<16x128xi1>, vector<16x128xf32>
    %14 = arith.truncf %13 : vector<16x128xf32> to vector<16x128xbf16>
    %c0_8 = arith.constant 0 : index
    %c0_9 = arith.constant 0 : index
    %15 = vector.load %arg4[%c0_8, %c0_9] : memref<128x64xbf16, #tpu.memory_space<vmem>>, vector<128x64xbf16>
    %cst_10 = arith.constant dense<0.000000e+00> : vector<16x64xf32>
    %16 = tpu.matmul %14, %15, %cst_10 {dimension_numbers = #tpu.dot_dimension_numbers<[1], [0], [0], [1], [0, 0, 1, 1], [], []>} : vector<16x128xbf16>, vector<128x64xbf16>, vector<16x64xf32> -> vector<16x64xf32>
    %c0_11 = arith.constant 0 : index
    %c0_12 = arith.constant 0 : index
    %17 = vector.load %arg5[%c0_11, %c0_12] : memref<1x64xf32, #tpu.memory_space<vmem>>, vector<1x64xf32>
    %18 = vector.broadcast %17 : vector<1x64xf32> to vector<16x64xf32>
    %19 = arith.addf %16, %18 : vector<16x64xf32>
    %cst_13 = arith.constant 0.000000e+00 : f32
    %20 = vector.broadcast %cst_13 : f32 to vector<16x64xf32>
    %21 = arith.cmpf ogt, %19, %20 : vector<16x64xf32>
    %cst_14 = arith.constant 0.000000e+00 : f32
    %22 = vector.broadcast %cst_14 : f32 to vector<16x64xf32>
    %23 = arith.minimumf %19, %22 : vector<16x64xf32>
    %24 = math.exp %23 : vector<16x64xf32>
    %cst_15 = arith.constant 1.000000e+00 : f32
    %25 = vector.broadcast %cst_15 : f32 to vector<16x64xf32>
    %26 = arith.subf %24, %25 : vector<16x64xf32>
    %27 = arith.select %21, %19, %26 : vector<16x64xi1>, vector<16x64xf32>
    %28 = arith.truncf %27 : vector<16x64xf32> to vector<16x64xbf16>
    %c0_16 = arith.constant 0 : index
    %c0_17 = arith.constant 0 : index
    %29 = vector.load %arg6[%c0_16, %c0_17] : memref<64x32xbf16, #tpu.memory_space<vmem>>, vector<64x32xbf16>
    %cst_18 = arith.constant dense<0.000000e+00> : vector<16x32xf32>
    %30 = tpu.matmul %28, %29, %cst_18 {dimension_numbers = #tpu.dot_dimension_numbers<[1], [0], [0], [1], [0, 0, 1, 1], [], []>} : vector<16x64xbf16>, vector<64x32xbf16>, vector<16x32xf32> -> vector<16x32xf32>
    %c0_19 = arith.constant 0 : index
    %c0_20 = arith.constant 0 : index
    %31 = vector.load %arg7[%c0_19, %c0_20] : memref<1x32xf32, #tpu.memory_space<vmem>>, vector<1x32xf32>
    %32 = vector.broadcast %31 : vector<1x32xf32> to vector<16x32xf32>
    %33 = arith.addf %30, %32 : vector<16x32xf32>
    %cst_21 = arith.constant 0.000000e+00 : f32
    %34 = vector.broadcast %cst_21 : f32 to vector<16x32xf32>
    %35 = arith.cmpf ogt, %33, %34 : vector<16x32xf32>
    %cst_22 = arith.constant 0.000000e+00 : f32
    %36 = vector.broadcast %cst_22 : f32 to vector<16x32xf32>
    %37 = arith.minimumf %33, %36 : vector<16x32xf32>
    %38 = math.exp %37 : vector<16x32xf32>
    %cst_23 = arith.constant 1.000000e+00 : f32
    %39 = vector.broadcast %cst_23 : f32 to vector<16x32xf32>
    %40 = arith.subf %38, %39 : vector<16x32xf32>
    %41 = arith.select %35, %33, %40 : vector<16x32xi1>, vector<16x32xf32>
    %42 = arith.truncf %41 : vector<16x32xf32> to vector<16x32xbf16>
    %c0_24 = arith.constant 0 : index
    %c0_25 = arith.constant 0 : index
    %43 = vector.load %arg8[%c0_24, %c0_25] : memref<32x32xbf16, #tpu.memory_space<vmem>>, vector<32x32xbf16>
    %cst_26 = arith.constant dense<0.000000e+00> : vector<16x32xf32>
    %44 = tpu.matmul %42, %43, %cst_26 {dimension_numbers = #tpu.dot_dimension_numbers<[1], [0], [0], [1], [0, 0, 1, 1], [], []>} : vector<16x32xbf16>, vector<32x32xbf16>, vector<16x32xf32> -> vector<16x32xf32>
    %c0_27 = arith.constant 0 : index
    %c0_28 = arith.constant 0 : index
    %45 = vector.load %arg9[%c0_27, %c0_28] : memref<1x32xf32, #tpu.memory_space<vmem>>, vector<1x32xf32>
    %46 = vector.broadcast %45 : vector<1x32xf32> to vector<16x32xf32>
    %47 = arith.addf %44, %46 : vector<16x32xf32>
    %cst_29 = arith.constant 0.000000e+00 : f32
    %48 = vector.broadcast %cst_29 : f32 to vector<16x32xf32>
    %49 = arith.cmpf ogt, %47, %48 : vector<16x32xf32>
    %cst_30 = arith.constant 0.000000e+00 : f32
    %50 = vector.broadcast %cst_30 : f32 to vector<16x32xf32>
    %51 = arith.minimumf %47, %50 : vector<16x32xf32>
    %52 = math.exp %51 : vector<16x32xf32>
    %cst_31 = arith.constant 1.000000e+00 : f32
    %53 = vector.broadcast %cst_31 : f32 to vector<16x32xf32>
    %54 = arith.subf %52, %53 : vector<16x32xf32>
    %55 = arith.select %49, %47, %54 : vector<16x32xi1>, vector<16x32xf32>
    %56 = arith.truncf %55 : vector<16x32xf32> to vector<16x32xbf16>
    %c0_32 = arith.constant 0 : index
    %c0_33 = arith.constant 0 : index
    %57 = vector.load %arg10[%c0_32, %c0_33] : memref<32x32xbf16, #tpu.memory_space<vmem>>, vector<32x32xbf16>
    %cst_34 = arith.constant dense<0.000000e+00> : vector<16x32xf32>
    %58 = tpu.matmul %56, %57, %cst_34 {dimension_numbers = #tpu.dot_dimension_numbers<[1], [0], [0], [1], [0, 0, 1, 1], [], []>} : vector<16x32xbf16>, vector<32x32xbf16>, vector<16x32xf32> -> vector<16x32xf32>
    %c0_35 = arith.constant 0 : index
    %c0_36 = arith.constant 0 : index
    %59 = vector.load %arg11[%c0_35, %c0_36] : memref<1x32xf32, #tpu.memory_space<vmem>>, vector<1x32xf32>
    %60 = vector.broadcast %59 : vector<1x32xf32> to vector<16x32xf32>
    %61 = arith.addf %58, %60 : vector<16x32xf32>
    %cst_37 = arith.constant 0.000000e+00 : f32
    %62 = vector.broadcast %cst_37 : f32 to vector<16x32xf32>
    %63 = arith.cmpf ogt, %61, %62 : vector<16x32xf32>
    %cst_38 = arith.constant 0.000000e+00 : f32
    %64 = vector.broadcast %cst_38 : f32 to vector<16x32xf32>
    %65 = arith.minimumf %61, %64 : vector<16x32xf32>
    %66 = math.exp %65 : vector<16x32xf32>
    %cst_39 = arith.constant 1.000000e+00 : f32
    %67 = vector.broadcast %cst_39 : f32 to vector<16x32xf32>
    %68 = arith.subf %66, %67 : vector<16x32xf32>
    %69 = arith.select %63, %61, %68 : vector<16x32xi1>, vector<16x32xf32>
    %70 = arith.addf %41, %69 : vector<16x32xf32>
    %71 = arith.truncf %70 : vector<16x32xf32> to vector<16x32xbf16>
    %c0_40 = arith.constant 0 : index
    %c0_41 = arith.constant 0 : index
    %72 = vector.load %arg12[%c0_40, %c0_41] : memref<32x128xbf16, #tpu.memory_space<vmem>>, vector<32x128xbf16>
    %cst_42 = arith.constant dense<0.000000e+00> : vector<16x128xf32>
    %73 = tpu.matmul %71, %72, %cst_42 {dimension_numbers = #tpu.dot_dimension_numbers<[1], [0], [0], [1], [0, 0, 1, 1], [], []>} : vector<16x32xbf16>, vector<32x128xbf16>, vector<16x128xf32> -> vector<16x128xf32>
    %c0_43 = arith.constant 0 : index
    %c0_44 = arith.constant 0 : index
    %74 = vector.load %arg13[%c0_43, %c0_44] : memref<1x128xf32, #tpu.memory_space<vmem>>, vector<1x128xf32>
    %75 = vector.broadcast %74 : vector<1x128xf32> to vector<16x128xf32>
    %76 = arith.addf %73, %75 : vector<16x128xf32>
    %cst_45 = arith.constant 0.000000e+00 : f32
    %77 = vector.broadcast %cst_45 : f32 to vector<16x128xf32>
    %78 = arith.cmpf ogt, %76, %77 : vector<16x128xf32>
    %cst_46 = arith.constant 0.000000e+00 : f32
    %79 = vector.broadcast %cst_46 : f32 to vector<16x128xf32>
    %80 = arith.minimumf %76, %79 : vector<16x128xf32>
    %81 = math.exp %80 : vector<16x128xf32>
    %cst_47 = arith.constant 1.000000e+00 : f32
    %82 = vector.broadcast %cst_47 : f32 to vector<16x128xf32>
    %83 = arith.subf %81, %82 : vector<16x128xf32>
    %84 = arith.select %78, %76, %83 : vector<16x128xi1>, vector<16x128xf32>
    %85 = arith.truncf %84 : vector<16x128xf32> to vector<16x128xbf16>
    %c0_48 = arith.constant 0 : index
    %c0_49 = arith.constant 0 : index
    %86 = vector.load %arg14[%c0_48, %c0_49] : memref<16x128xbf16, #tpu.memory_space<vmem>>, vector<16x128xbf16>
    tpu.vector_store %arg14[%c0_48, %c0_49], %85 {strides = array<i32>} : memref<16x128xbf16, #tpu.memory_space<vmem>>, vector<16x128xbf16>,
    return
  }
  func.func @transform_0(%arg0: i32) -> (i32, i32) {
    %c0_i32 = arith.constant 0 : i32
    %c0_i32_0 = arith.constant 0 : i32
    return %arg0, %c0_i32 : i32, i32
  }
  func.func @transform_1(%arg0: i32) -> (i32, i32) {
    %c0_i32 = arith.constant 0 : i32
    %c0_i32_0 = arith.constant 0 : i32
    %c0_i32_1 = arith.constant 0 : i32
    return %c0_i32, %c0_i32_0 : i32, i32
  }
  func.func @transform_2(%arg0: i32) -> (i32, i32) {
    %c0_i32 = arith.constant 0 : i32
    %c0_i32_0 = arith.constant 0 : i32
    %c0_i32_1 = arith.constant 0 : i32
    return %c0_i32, %c0_i32_0 : i32, i32
  }
  func.func @transform_3(%arg0: i32) -> (i32, i32) {
    %c0_i32 = arith.constant 0 : i32
    %c0_i32_0 = arith.constant 0 : i32
    %c0_i32_1 = arith.constant 0 : i32
    return %c0_i32, %c0_i32_0 : i32, i32
  }
  func.func @transform_4(%arg0: i32) -> (i32, i32) {
    %c0_i32 = arith.constant 0 : i32
    %c0_i32_0 = arith.constant 0 : i32
    %c0_i32_1 = arith.constant 0 : i32
    return %c0_i32, %c0_i32_0 : i32, i32
  }
  func.func @transform_5(%arg0: i32) -> (i32, i32) {
    %c0_i32 = arith.constant 0 : i32
    %c0_i32_0 = arith.constant 0 : i32
    %c0_i32_1 = arith.constant 0 : i32
    return %c0_i32, %c0_i32_0 : i32, i32
  }
  func.func @transform_6(%arg0: i32) -> (i32, i32) {
    %c0_i32 = arith.constant 0 : i32
    %c0_i32_0 = arith.constant 0 : i32
    %c0_i32_1 = arith.constant 0 : i32
    return %c0_i32, %c0_i32_0 : i32, i32
  }
  func.func @transform_7(%arg0: i32) -> (i32, i32) {
    %c0_i32 = arith.constant 0 : i32
    %c0_i32_0 = arith.constant 0 : i32
    %c0_i32_1 = arith.constant 0 : i32
    return %c0_i32, %c0_i32_0 : i32, i32
  }
  func.func @transform_8(%arg0: i32) -> (i32, i32) {
    %c0_i32 = arith.constant 0 : i32
    %c0_i32_0 = arith.constant 0 : i32
    %c0_i32_1 = arith.constant 0 : i32
    return %c0_i32, %c0_i32_0 : i32, i32
  }
  func.func @transform_9(%arg0: i32) -> (i32, i32) {
    %c0_i32 = arith.constant 0 : i32
    %c0_i32_0 = arith.constant 0 : i32
    %c0_i32_1 = arith.constant 0 : i32
    return %c0_i32, %c0_i32_0 : i32, i32
  }
  func.func @transform_10(%arg0: i32) -> (i32, i32) {
    %c0_i32 = arith.constant 0 : i32
    %c0_i32_0 = arith.constant 0 : i32
    %c0_i32_1 = arith.constant 0 : i32
    return %c0_i32, %c0_i32_0 : i32, i32
  }
  func.func @transform_11(%arg0: i32) -> (i32, i32) {
    %c0_i32 = arith.constant 0 : i32
    %c0_i32_0 = arith.constant 0 : i32
    %c0_i32_1 = arith.constant 0 : i32
    return %c0_i32, %c0_i32_0 : i32, i32
  }
  func.func @transform_12(%arg0: i32) -> (i32, i32) {
    %c0_i32 = arith.constant 0 : i32
    %c0_i32_0 = arith.constant 0 : i32
    %c0_i32_1 = arith.constant 0 : i32
    return %c0_i32, %c0_i32_0 : i32, i32
  }
  func.func @transform_13(%arg0: i32) -> (i32, i32) {
    %c0_i32 = arith.constant 0 : i32
    %c0_i32_0 = arith.constant 0 : i32
    return %arg0, %c0_i32 : i32, i32
  }
}

</mosaic_0001>

<llo_original>
// kernel: autoencoder_classifier.1
$region0: #{autoencoder_classifier.1}
  #allocation0 [shape = 'u32[]', space=smem, size = 0x4, offset = 0x4, fixed_abs, tag = 'smem constant byte address 0x4 - core index']
  #allocation1 [shape = 'u32[144,128]{1,0:T(1,128)}', space=vmem, size = 0x12000, scoped, tag = 'internal scratch']
  %s0 = inlined_call_operand.vmem [shape: bf16[32,768], index: 0, kind: input, shape index: {}]
  %s1 = inlined_call_operand.vmem [shape: bf16[768,128], index: 1, kind: input, shape index: {}]
  %s2 = inlined_call_operand.vmem [shape: f32[1,128], index: 2, kind: input, shape index: {}]
  %s3 = inlined_call_operand.vmem [shape: bf16[128,64], index: 3, kind: input, shape index: {}]
  %s4 = inlined_call_operand.vmem [shape: f32[1,64], index: 4, kind: input, shape index: {}]
  %s5 = inlined_call_operand.vmem [shape: bf16[64,32], index: 5, kind: input, shape index: {}]
  %s6 = inlined_call_operand.vmem [shape: f32[1,32], index: 6, kind: input, shape index: {}]
  %s7 = inlined_call_operand.vmem [shape: bf16[32,32], index: 7, kind: input, shape index: {}]
  %s8 = inlined_call_operand.vmem [shape: f32[1,32], index: 8, kind: input, shape index: {}]
  %s9 = inlined_call_operand.vmem [shape: bf16[32,32], index: 9, kind: input, shape index: {}]
  %s10 = inlined_call_operand.vmem [shape: f32[1,32], index: 10, kind: input, shape index: {}]
  %s11 = inlined_call_operand.vmem [shape: bf16[32,128], index: 11, kind: input, shape index: {}]
  %s12 = inlined_call_operand.vmem [shape: f32[1,128], index: 12, kind: input, shape index: {}]
  %s13 = inlined_call_operand.vmem [shape: bf16[32,128], index: 13, kind: output, shape index: {}]
  %s14 = sld [smem:[#allocation0]]
  $region85: #{autoencoder_classifier.1} parent=0
    _
  %s16 = ssub.s32 1, %s14
  %s17 = scalar_select 0, %s16, %s14
  loop: start=0, step=1, limit=4
  $region2: #{autoencoder_classifier.1} parent=0 // loop_pre_header
    _
  $region3: #{autoencoder_classifier.1} parent=0 // loop_header
    %s19 = sphi 0, %s23
    %p20 = scmp.ge.s32.totalorder %s19, 4
    %s29 = sphi 0, %s31
    %s32 = sphi 0, %s29
    %s33 = sphi 0, %s32
    %s49 = sphi 0, %s33
    %s53 = sphi 0, %s53
    %s55 = sphi 0, %s53
    %s56 = sphi 0, %s55
    %s70 = sphi 0, %s56
    %s74 = sphi 0, %s74
    %s76 = sphi 0, %s74
    %s77 = sphi 0, %s76
    %s91 = sphi 0, %s77
    %s95 = sphi 0, %s95
    %s97 = sphi 0, %s95
    %s98 = sphi 0, %s97
    %s112 = sphi 0, %s98
    %s116 = sphi 0, %s116
    %s118 = sphi 0, %s116
    %s119 = sphi 0, %s118
    %s133 = sphi 0, %s119
    %s137 = sphi 0, %s137
    %s139 = sphi 0, %s137
    %s140 = sphi 0, %s139
    %s154 = sphi 0, %s140
    %s158 = sphi 0, %s158
    %s160 = sphi 0, %s158
    %s161 = sphi 0, %s160
    %s175 = sphi 0, %s161
    %s179 = sphi 0, %s179
    %s181 = sphi 0, %s179
    %s182 = sphi 0, %s181
    %s196 = sphi 0, %s182
    %s200 = sphi 0, %s200
    %s202 = sphi 0, %s200
    %s203 = sphi 0, %s202
    %s217 = sphi 0, %s203
    %s221 = sphi 0, %s221
    %s223 = sphi 0, %s221
    %s224 = sphi 0, %s223
    %s238 = sphi 0, %s224
    %s242 = sphi 0, %s242
    %s244 = sphi 0, %s242
    %s245 = sphi 0, %s244
    %s259 = sphi 0, %s245
    %s263 = sphi 0, %s263
    %s265 = sphi 0, %s263
    %s266 = sphi 0, %s265
    %s280 = sphi 0, %s266
    %s284 = sphi 0, %s284
    %s286 = sphi 0, %s284
    %s287 = sphi 0, %s286
    %s301 = sphi 0, %s287
    %s307 = sphi 0, %s309
    %s310 = sphi 0, %s307
    %s311 = sphi 0, %s310
    %s327 = sphi 0, %s311
  $region4: #{autoencoder_classifier.1} parent=0 // loop_header_branch
    %22 = sbr.rel (%p20) target = $region8
  $region5: #{autoencoder_classifier.1} parent=0 // loop_body
    %s24 = ssub.s32 %s19, 1
    %s25 = ssub.s32 %s19, 2
    %s26 = sadd.s32 %s19, 1
    %s27 = ssub.s32 %s19, %s26
    %p28 = scmp.eq.s32.totalorder %s27, 0
    %s30 = sadd.s32 %s29, 1
    %s31 = scalar_select %p28, %s29, %s30
    %p34 = pneg %p28
    %p35 = scmp.eq.s32.totalorder %s19, 1
    %p36 = por %p34, %p35
    %p37 = scmp.ne.s32.totalorder %s29, %s32
    %p38 = scmp.eq.s32.totalorder %s19, 0
    %p39 = por %p37, %p38
    %p40 = scmp.ne.s32.totalorder %s29, %s32
    %p41 = scmp.eq.s32.totalorder %s24, 1
    %p42 = por %p40, %p41
    %p43 = scmp.ne.s32.totalorder %s32, %s33
    %p44 = scmp.eq.s32.totalorder %s24, 0
    %p45 = por %p43, %p44
    %p46 = scmp.ne.s32.totalorder %s32, %s33
    %p47 = scmp.eq.s32.totalorder %s25, 1
    %p48 = por %p46, %p47
    %p50 = scmp.ne.s32.totalorder %s33, %s49
    %p51 = scmp.eq.s32.totalorder %s25, 0
    %p52 = por %p50, %p51
    %s54 = sadd.s32 %s53, 1
    %p57 = scmp.eq.s32.totalorder %s19, 1
    %p58 = scmp.ne.s32.totalorder %s53, %s55
    %p59 = scmp.eq.s32.totalorder %s19, 0
    %p60 = por %p58, %p59
    %p61 = scmp.ne.s32.totalorder %s53, %s55
    %p62 = scmp.eq.s32.totalorder %s24, 1
    %p63 = por %p61, %p62
    %p64 = scmp.ne.s32.totalorder %s55, %s56
    %p65 = scmp.eq.s32.totalorder %s24, 0
    %p66 = por %p64, %p65
    %p67 = scmp.ne.s32.totalorder %s55, %s56
    %p68 = scmp.eq.s32.totalorder %s25, 1
    %p69 = por %p67, %p68
    %p71 = scmp.ne.s32.totalorder %s56, %s70
    %p72 = scmp.eq.s32.totalorder %s25, 0
    %p73 = por %p71, %p72
    %s75 = sadd.s32 %s74, 1
    %p78 = scmp.eq.s32.totalorder %s19, 1
    %p79 = scmp.ne.s32.totalorder %s74, %s76
    %p80 = scmp.eq.s32.totalorder %s19, 0
    %p81 = por %p79, %p80
    %p82 = scmp.ne.s32.totalorder %s74, %s76
    %p83 = scmp.eq.s32.totalorder %s24, 1
    %p84 = por %p82, %p83
    %p85 = scmp.ne.s32.totalorder %s76, %s77
    %p86 = scmp.eq.s32.totalorder %s24, 0
    %p87 = por %p85, %p86
    %p88 = scmp.ne.s32.totalorder %s76, %s77
    %p89 = scmp.eq.s32.totalorder %s25, 1
    %p90 = por %p88, %p89
    %p92 = scmp.ne.s32.totalorder %s77, %s91
    %p93 = scmp.eq.s32.totalorder %s25, 0
    %p94 = por %p92, %p93
    %s96 = sadd.s32 %s95, 1
    %p99 = scmp.eq.s32.totalorder %s19, 1
    %p100 = scmp.ne.s32.totalorder %s95, %s97
    %p101 = scmp.eq.s32.totalorder %s19, 0
    %p102 = por %p100, %p101
    %p103 = scmp.ne.s32.totalorder %s95, %s97
    %p104 = scmp.eq.s32.totalorder %s24, 1
    %p105 = por %p103, %p104
    %p106 = scmp.ne.s32.totalorder %s97, %s98
    %p107 = scmp.eq.s32.totalorder %s24, 0
    %p108 = por %p106, %p107
    %p109 = scmp.ne.s32.totalorder %s97, %s98
    %p110 = scmp.eq.s32.totalorder %s25, 1
    %p111 = por %p109, %p110
    %p113 = scmp.ne.s32.totalorder %s98, %s112
    %p114 = scmp.eq.s32.totalorder %s25, 0
    %p115 = por %p113, %p114
    %s117 = sadd.s32 %s116, 1
    %p120 = scmp.eq.s32.totalorder %s19, 1
    %p121 = scmp.ne.s32.totalorder %s116, %s118
    %p122 = scmp.eq.s32.totalorder %s19, 0
    %p123 = por %p121, %p122
    %p124 = scmp.ne.s32.totalorder %s116, %s118
    %p125 = scmp.eq.s32.totalorder %s24, 1
    %p126 = por %p124, %p125
    %p127 = scmp.ne.s32.totalorder %s118, %s119
    %p128 = scmp.eq.s32.totalorder %s24, 0
    %p129 = por %p127, %p128
    %p130 = scmp.ne.s32.totalorder %s118, %s119
    %p131 = scmp.eq.s32.totalorder %s25, 1
    %p132 = por %p130, %p131
    %p134 = scmp.ne.s32.totalorder %s119, %s133
    %p135 = scmp.eq.s32.totalorder %s25, 0
    %p136 = por %p134, %p135
    %s138 = sadd.s32 %s137, 1
    %p141 = scmp.eq.s32.totalorder %s19, 1
    %p142 = scmp.ne.s32.totalorder %s137, %s139
    %p143 = scmp.eq.s32.totalorder %s19, 0
    %p144 = por %p142, %p143
    %p145 = scmp.ne.s32.totalorder %s137, %s139
    %p146 = scmp.eq.s32.totalorder %s24, 1
    %p147 = por %p145, %p146
    %p148 = scmp.ne.s32.totalorder %s139, %s140
    %p149 = scmp.eq.s32.totalorder %s24, 0
    %p150 = por %p148, %p149
    %p151 = scmp.ne.s32.totalorder %s139, %s140
    %p152 = scmp.eq.s32.totalorder %s25, 1
    %p153 = por %p151, %p152
    %p155 = scmp.ne.s32.totalorder %s140, %s154
    %p156 = scmp.eq.s32.totalorder %s25, 0
    %p157 = por %p155, %p156
    %s159 = sadd.s32 %s158, 1
    %p162 = scmp.eq.s32.totalorder %s19, 1
    %p163 = scmp.ne.s32.totalorder %s158, %s160
    %p164 = scmp.eq.s32.totalorder %s19, 0
    %p165 = por %p163, %p164
    %p166 = scmp.ne.s32.totalorder %s158, %s160
    %p167 = scmp.eq.s32.totalorder %s24, 1
    %p168 = por %p166, %p167
    %p169 = scmp.ne.s32.totalorder %s160, %s161
    %p170 = scmp.eq.s32.totalorder %s24, 0
    %p171 = por %p169, %p170
    %p172 = scmp.ne.s32.totalorder %s160, %s161
    %p173 = scmp.eq.s32.totalorder %s25, 1
    %p174 = por %p172, %p173
    %p176 = scmp.ne.s32.totalorder %s161, %s175
    %p177 = scmp.eq.s32.totalorder %s25, 0
    %p178 = por %p176, %p177
    %s180 = sadd.s32 %s179, 1
    %p183 = scmp.eq.s32.totalorder %s19, 1
    %p184 = scmp.ne.s32.totalorder %s179, %s181
    %p185 = scmp.eq.s32.totalorder %s19, 0
    %p186 = por %p184, %p185
    %p187 = scmp.ne.s32.totalorder %s179, %s181
    %p188 = scmp.eq.s32.totalorder %s24, 1
    %p189 = por %p187, %p188
    %p190 = scmp.ne.s32.totalorder %s181, %s182
    %p191 = scmp.eq.s32.totalorder %s24, 0
    %p192 = por %p190, %p191
    %p193 = scmp.ne.s32.totalorder %s181, %s182
    %p194 = scmp.eq.s32.totalorder %s25, 1
    %p195 = por %p193, %p194
    %p197 = scmp.ne.s32.totalorder %s182, %s196
    %p198 = scmp.eq.s32.totalorder %s25, 0
    %p199 = por %p197, %p198
    %s201 = sadd.s32 %s200, 1
    %p204 = scmp.eq.s32.totalorder %s19, 1
    %p205 = scmp.ne.s32.totalorder %s200, %s202
    %p206 = scmp.eq.s32.totalorder %s19, 0
    %p207 = por %p205, %p206
    %p208 = scmp.ne.s32.totalorder %s200, %s202
    %p209 = scmp.eq.s32.totalorder %s24, 1
    %p210 = por %p208, %p209
    %p211 = scmp.ne.s32.totalorder %s202, %s203
    %p212 = scmp.eq.s32.totalorder %s24, 0
    %p213 = por %p211, %p212
    %p214 = scmp.ne.s32.totalorder %s202, %s203
    %p215 = scmp.eq.s32.totalorder %s25, 1
    %p216 = por %p214, %p215
    %p218 = scmp.ne.s32.totalorder %s203, %s217
    %p219 = scmp.eq.s32.totalorder %s25, 0
    %p220 = por %p218, %p219
    %s222 = sadd.s32 %s221, 1
    %p225 = scmp.eq.s32.totalorder %s19, 1
    %p226 = scmp.ne.s32.totalorder %s221, %s223
    %p227 = scmp.eq.s32.totalorder %s19, 0
    %p228 = por %p226, %p227
    %p229 = scmp.ne.s32.totalorder %s221, %s223
    %p230 = scmp.eq.s32.totalorder %s24, 1
    %p231 = por %p229, %p230
    %p232 = scmp.ne.s32.totalorder %s223, %s224
    %p233 = scmp.eq.s32.totalorder %s24, 0
    %p234 = por %p232, %p233
    %p235 = scmp.ne.s32.totalorder %s223, %s224
    %p236 = scmp.eq.s32.totalorder %s25, 1
    %p237 = por %p235, %p236
    %p239 = scmp.ne.s32.totalorder %s224, %s238
    %p240 = scmp.eq.s32.totalorder %s25, 0
    %p241 = por %p239, %p240
    %s243 = sadd.s32 %s242, 1
    %p246 = scmp.eq.s32.totalorder %s19, 1
    %p247 = scmp.ne.s32.totalorder %s242, %s244
    %p248 = scmp.eq.s32.totalorder %s19, 0
    %p249 = por %p247, %p248
    %p250 = scmp.ne.s32.totalorder %s242, %s244
    %p251 = scmp.eq.s32.totalorder %s24, 1
    %p252 = por %p250, %p251
    %p253 = scmp.ne.s32.totalorder %s244, %s245
    %p254 = scmp.eq.s32.totalorder %s24, 0
    %p255 = por %p253, %p254
    %p256 = scmp.ne.s32.totalorder %s244, %s245
    %p257 = scmp.eq.s32.totalorder %s25, 1
    %p258 = por %p256, %p257
    %p260 = scmp.ne.s32.totalorder %s245, %s259
    %p261 = scmp.eq.s32.totalorder %s25, 0
    %p262 = por %p260, %p261
    %s264 = sadd.s32 %s263, 1
    %p267 = scmp.eq.s32.totalorder %s19, 1
    %p268 = scmp.ne.s32.totalorder %s263, %s265
    %p269 = scmp.eq.s32.totalorder %s19, 0
    %p270 = por %p268, %p269
    %p271 = scmp.ne.s32.totalorder %s263, %s265
    %p272 = scmp.eq.s32.totalorder %s24, 1
    %p273 = por %p271, %p272
    %p274 = scmp.ne.s32.totalorder %s265, %s266
    %p275 = scmp.eq.s32.totalorder %s24, 0
    %p276 = por %p274, %p275
    %p277 = scmp.ne.s32.totalorder %s265, %s266
    %p278 = scmp.eq.s32.totalorder %s25, 1
    %p279 = por %p277, %p278
    %p281 = scmp.ne.s32.totalorder %s266, %s280
    %p282 = scmp.eq.s32.totalorder %s25, 0
    %p283 = por %p281, %p282
    %s285 = sadd.s32 %s284, 1
    %p288 = scmp.eq.s32.totalorder %s19, 1
    %p289 = scmp.ne.s32.totalorder %s284, %s286
    %p290 = scmp.eq.s32.totalorder %s19, 0
    %p291 = por %p289, %p290
    %p292 = scmp.ne.s32.totalorder %s284, %s286
    %p293 = scmp.eq.s32.totalorder %s24, 1
    %p294 = por %p292, %p293
    %p295 = scmp.ne.s32.totalorder %s286, %s287
    %p296 = scmp.eq.s32.totalorder %s24, 0
    %p297 = por %p295, %p296
    %p298 = scmp.ne.s32.totalorder %s286, %s287
    %p299 = scmp.eq.s32.totalorder %s25, 1
    %p300 = por %p298, %p299
    %p302 = scmp.ne.s32.totalorder %s287, %s301
    %p303 = scmp.eq.s32.totalorder %s25, 0
    %p304 = por %p302, %p303
    %s305 = ssub.s32 %s19, %s26
    %p306 = scmp.eq.s32.totalorder %s305, 0
    %s308 = sadd.s32 %s307, 1
    %s309 = scalar_select %p306, %s307, %s308
    %p312 = pneg %p306
    %p313 = scmp.eq.s32.totalorder %s19, 1
    %p314 = por %p312, %p313
    %p315 = scmp.ne.s32.totalorder %s307, %s310
    %p316 = scmp.eq.s32.totalorder %s19, 0
    %p317 = por %p315, %p316
    %p318 = scmp.ne.s32.totalorder %s307, %s310
    %p319 = scmp.eq.s32.totalorder %s24, 1
    %p320 = por %p318, %p319
    %p321 = scmp.ne.s32.totalorder %s310, %s311
    %p322 = scmp.eq.s32.totalorder %s24, 0
    %p323 = por %p321, %p322
    %p324 = scmp.ne.s32.totalorder %s310, %s311
    %p325 = scmp.eq.s32.totalorder %s25, 1
    %p326 = por %p324, %p325
    %p328 = scmp.ne.s32.totalorder %s311, %s327
    %p329 = scmp.eq.s32.totalorder %s25, 0
    %p330 = por %p328, %p329
    %p331 = scmp.le.s32.totalorder 1, %s19
    %p332 = scmp.lt.s32.totalorder %s19, 3
    %p333 = pnand %p331, %p332
    %p334 = pneg %p333
    // Predicated region
    $region9: #{autoencoder_classifier.1} parent=5 // pred_check
      _
    $region10: #{autoencoder_classifier.1} parent=5 // pred_check_branch
      %336 = sbr.rel (%p333) target = $region12
    $region11: #{autoencoder_classifier.1} parent=5 // pred_region
      %s337 = ssub.s32 %s19, 1
      // Predicated region
      $region13: #{autoencoder_classifier.1} parent=11 // pred_check
        %p338 = pneg %p66
      $region14: #{autoencoder_classifier.1} parent=11 // pred_check_branch
        %340 = sbr.rel (%p338) target = $region16
      $region15: #{autoencoder_classifier.1} parent=11 // pred_region
        _
      $region16: #{autoencoder_classifier.1} parent=11 // pred_fallthru
        _
      // Predicated region
      $region17: #{autoencoder_classifier.1} parent=11 // pred_check
        %p341 = pneg %p87
      $region18: #{autoencoder_classifier.1} parent=11 // pred_check_branch
        %343 = sbr.rel (%p341) target = $region20
      $region19: #{autoencoder_classifier.1} parent=11 // pred_region
        _
      $region20: #{autoencoder_classifier.1} parent=11 // pred_fallthru
        _
      // Predicated region
      $region21: #{autoencoder_classifier.1} parent=11 // pred_check
        %p344 = pneg %p108
      $region22: #{autoencoder_classifier.1} parent=11 // pred_check_branch
        %346 = sbr.rel (%p344) target = $region24
      $region23: #{autoencoder_classifier.1} parent=11 // pred_region
        _
      $region24: #{autoencoder_classifier.1} parent=11 // pred_fallthru
        _
      // Predicated region
      $region25: #{autoencoder_classifier.1} parent=11 // pred_check
        %p347 = pneg %p129
      $region26: #{autoencoder_classifier.1} parent=11 // pred_check_branch
        %349 = sbr.rel (%p347) target = $region28
      $region27: #{autoencoder_classifier.1} parent=11 // pred_region
        _
      $region28: #{autoencoder_classifier.1} parent=11 // pred_fallthru
        _
      // Predicated region
      $region29: #{autoencoder_classifier.1} parent=11 // pred_check
        %p350 = pneg %p150
      $region30: #{autoencoder_classifier.1} parent=11 // pred_check_branch
        %352 = sbr.rel (%p350) target = $region32
      $region31: #{autoencoder_classifier.1} parent=11 // pred_region
        _
      $region32: #{autoencoder_classifier.1} parent=11 // pred_fallthru
        _
      // Predicated region
      $region33: #{autoencoder_classifier.1} parent=11 // pred_check
        %p353 = pneg %p171
      $region34: #{autoencoder_classifier.1} parent=11 // pred_check_branch
        %355 = sbr.rel (%p353) target = $region36
      $region35: #{autoencoder_classifier.1} parent=11 // pred_region
        _
      $region36: #{autoencoder_classifier.1} parent=11 // pred_fallthru
        _
      // Predicated region
      $region37: #{autoencoder_classifier.1} parent=11 // pred_check
        %p356 = pneg %p192
      $region38: #{autoencoder_classifier.1} parent=11 // pred_check_branch
        %358 = sbr.rel (%p356) target = $region40
      $region39: #{autoencoder_classifier.1} parent=11 // pred_region
        _
      $region40: #{autoencoder_classifier.1} parent=11 // pred_fallthru
        _
      // Predicated region
      $region41: #{autoencoder_classifier.1} parent=11 // pred_check
        %p359 = pneg %p213
      $region42: #{autoencoder_classifier.1} parent=11 // pred_check_branch
        %361 = sbr.rel (%p359) target = $region44
      $region43: #{autoencoder_classifier.1} parent=11 // pred_region
        _
      $region44: #{autoencoder_classifier.1} parent=11 // pred_fallthru
        _
      // Predicated region
      $region45: #{autoencoder_classifier.1} parent=11 // pred_check
        %p362 = pneg %p234
      $region46: #{autoencoder_classifier.1} parent=11 // pred_check_branch
        %364 = sbr.rel (%p362) target = $region48
      $region47: #{autoencoder_classifier.1} parent=11 // pred_region
        _
      $region48: #{autoencoder_classifier.1} parent=11 // pred_fallthru
        _
      // Predicated region
      $region49: #{autoencoder_classifier.1} parent=11 // pred_check
        %p365 = pneg %p255
      $region50: #{autoencoder_classifier.1} parent=11 // pred_check_branch
        %367 = sbr.rel (%p365) target = $region52
      $region51: #{autoencoder_classifier.1} parent=11 // pred_region
        _
      $region52: #{autoencoder_classifier.1} parent=11 // pred_fallthru
        _
      // Predicated region
      $region53: #{autoencoder_classifier.1} parent=11 // pred_check
        %p368 = pneg %p276
      $region54: #{autoencoder_classifier.1} parent=11 // pred_check_branch
        %370 = sbr.rel (%p368) target = $region56
      $region55: #{autoencoder_classifier.1} parent=11 // pred_region
        _
      $region56: #{autoencoder_classifier.1} parent=11 // pred_fallthru
        _
      // Predicated region
      $region57: #{autoencoder_classifier.1} parent=11 // pred_check
        %p371 = pneg %p297
      $region58: #{autoencoder_classifier.1} parent=11 // pred_check_branch
        %373 = sbr.rel (%p371) target = $region60
      $region59: #{autoencoder_classifier.1} parent=11 // pred_region
        _
      $region60: #{autoencoder_classifier.1} parent=11 // pred_fallthru
        _
    $region12: #{autoencoder_classifier.1} parent=5 // pred_fallthru
      _
    %p374 = scmp.lt.s32.totalorder %s19, 2
    // Predicated region
    $region61: #{autoencoder_classifier.1} parent=5 // pred_check
      %p375 = pneg %p374
    $region62: #{autoencoder_classifier.1} parent=5 // pred_check_branch
      %377 = sbr.rel (%p375) target = $region64
    $region63: #{autoencoder_classifier.1} parent=5 // pred_region
      // Predicated region
      $region65: #{autoencoder_classifier.1} parent=63 // pred_check
        %p378 = pneg %p39
      $region66: #{autoencoder_classifier.1} parent=63 // pred_check_branch
        %380 = sbr.rel (%p378) target = $region68
      $region67: #{autoencoder_classifier.1} parent=63 // pred_region
        %s381 = smul.u32 2, %s19
        %p382 = scmp.lt.s32.totalorder %s381, 3
        %s383 = scalar_select %p382, %s381, 3
        %s384 = smul.addr %s383, 6
        %s385 = smul.addr %s384, 4
        %s386 = scalar_lea.vmem %s0, %s385
        %s387 = smul.u32 2, %s19
      $region68: #{autoencoder_classifier.1} parent=63 // pred_fallthru
        _
    $region64: #{autoencoder_classifier.1} parent=5 // pred_fallthru
      _
    %p388 = scmp.le.s32.totalorder 1, %s19
    %p389 = scmp.lt.s32.totalorder %s19, 3
    %p390 = pnand %p388, %p389
    %p391 = pneg %p390
    // Predicated region
    $region69: #{autoencoder_classifier.1} parent=5 // pred_check
      _
    $region70: #{autoencoder_classifier.1} parent=5 // pred_check_branch
      %393 = sbr.rel (%p390) target = $region72
    $region71: #{autoencoder_classifier.1} parent=5 // pred_region
      %s394 = ssub.s32 %s19, 1
      %s395 = smul.u32 2, %s24
      %p396 = scmp.lt.s32.totalorder %s395, 3
      %s397 = scalar_select %p396, %s395, 3
      %s398 = smul.addr %s397, 6
      %s399 = smul.addr %s398, 4
      %s400 = scalar_lea.vmem %s0, %s399
      %p401 = pneg %p45
      %p402 = pneg %p42
      %p403 = pneg %p66
      %p404 = pneg %p63
      %p405 = pneg %p87
      %p406 = pneg %p84
      %p407 = pneg %p108
      %p408 = pneg %p105
      %p409 = pneg %p129
      %p410 = pneg %p126
      %p411 = pneg %p150
      %p412 = pneg %p147
      %p413 = pneg %p171
      %p414 = pneg %p168
      %p415 = pneg %p192
      %p416 = pneg %p189
      %p417 = pneg %p213
      %p418 = pneg %p210
      %p419 = pneg %p234
      %p420 = pneg %p231
      %p421 = pneg %p255
      %p422 = pneg %p252
      %p423 = pneg %p276
      %p424 = pneg %p273
      %p425 = pneg %p297
      %p426 = pneg %p294
      %p427 = pneg %p323
      %p428 = pneg %p320
      %s429 = smul.u32 2, %s24
      %p430 = scmp.lt.s32.totalorder %s429, 3
      %s431 = scalar_select %p430, %s429, 3
      %s432 = smul.addr %s431, 4
      %s433 = scalar_lea.vmem %s13, %s432
      %s434 = smul.u32 2, %s24
      %p435 = scmp.lt.s32.totalorder %s434, 3
      %s436 = scalar_select %p435, %s434, 3
      %s437 = smul.addr %s436, 6
      %s438 = smul.addr %s437, 4
      %s439 = scalar_lea.vmem %s0, %s438
      %s440 = smul.u32 2, %s24
      %s441 = smul.u32 2, %s24
      %p442 = scmp.lt.s32.totalorder %s441, 3
      %s443 = scalar_select %p442, %s441, 3
      %s444 = smul.addr %s443, 4
      %s445 = scalar_lea.vmem %s13, %s444
      %s446 = smul.u32 2, %s24
      %v448 = vld [vmem:[%s439] sm:$0xff]
      %v449 = vld [vmem:[%s439 + $0x8] sm:$0xff]
      %v450 = vld [vmem:[%s439 + $0x10] sm:$0xff]
      %v451 = vld [vmem:[%s439 + $0x18] sm:$0xff]
      %v452 = vld [vmem:[%s439 + $0x20] sm:$0xff]
      %v453 = vld [vmem:[%s439 + $0x28] sm:$0xff]
      %v454 = vld [vmem:[%s1] sm:$0xf]
      %v455 = vld [vmem:[%s1 + $0x4] sm:$0xf]
      %v456 = vld [vmem:[%s1 + $0x8] sm:$0xf]
      %v457 = vld [vmem:[%s1 + $0xc] sm:$0xf]
      %v458 = vld [vmem:[%s1 + $0x10] sm:$0xf]
      %v459 = vld [vmem:[%s1 + $0x14] sm:$0xf]
      %v460 = vld [vmem:[%s1 + $0x18] sm:$0xf]
      %v461 = vld [vmem:[%s1 + $0x1c] sm:$0xf]
      %v462 = vld [vmem:[%s1 + $0x20] sm:$0xf]
      %v463 = vld [vmem:[%s1 + $0x24] sm:$0xf]
      %v464 = vld [vmem:[%s1 + $0x28] sm:$0xf]
      %v465 = vld [vmem:[%s1 + $0x2c] sm:$0xf]
      %v466 = vld [vmem:[%s1 + $0x30] sm:$0xf]
      %v467 = vld [vmem:[%s1 + $0x34] sm:$0xf]
      %v468 = vld [vmem:[%s1 + $0x38] sm:$0xf]
      %v469 = vld [vmem:[%s1 + $0x3c] sm:$0xf]
      %v470 = vld [vmem:[%s1 + $0x40] sm:$0xf]
      %v471 = vld [vmem:[%s1 + $0x44] sm:$0xf]
      %v472 = vld [vmem:[%s1 + $0x48] sm:$0xf]
      %v473 = vld [vmem:[%s1 + $0x4c] sm:$0xf]
      %v474 = vld [vmem:[%s1 + $0x50] sm:$0xf]
      %v475 = vld [vmem:[%s1 + $0x54] sm:$0xf]
      %v476 = vld [vmem:[%s1 + $0x58] sm:$0xf]
      %v477 = vld [vmem:[%s1 + $0x5c] sm:$0xf]
      %v478 = vld [vmem:[%s1 + $0x60] sm:$0xf]
      %v479 = vld [vmem:[%s1 + $0x64] sm:$0xf]
      %v480 = vld [vmem:[%s1 + $0x68] sm:$0xf]
      %v481 = vld [vmem:[%s1 + $0x6c] sm:$0xf]
      %v482 = vld [vmem:[%s1 + $0x70] sm:$0xf]
      %v483 = vld [vmem:[%s1 + $0x74] sm:$0xf]
      %v484 = vld [vmem:[%s1 + $0x78] sm:$0xf]
      %v485 = vld [vmem:[%s1 + $0x7c] sm:$0xf]
      %v486 = vld [vmem:[%s1 + $0x80] sm:$0xf]
      %v487 = vld [vmem:[%s1 + $0x84] sm:$0xf]
      %v488 = vld [vmem:[%s1 + $0x88] sm:$0xf]
      %v489 = vld [vmem:[%s1 + $0x8c] sm:$0xf]
      %v490 = vld [vmem:[%s1 + $0x90] sm:$0xf]
      %v491 = vld [vmem:[%s1 + $0x94] sm:$0xf]
      %v492 = vld [vmem:[%s1 + $0x98] sm:$0xf]
      %v493 = vld [vmem:[%s1 + $0x9c] sm:$0xf]
      %v494 = vld [vmem:[%s1 + $0xa0] sm:$0xf]
      %v495 = vld [vmem:[%s1 + $0xa4] sm:$0xf]
      %v496 = vld [vmem:[%s1 + $0xa8] sm:$0xf]
      %v497 = vld [vmem:[%s1 + $0xac] sm:$0xf]
      %v498 = vld [vmem:[%s1 + $0xb0] sm:$0xf]
      %v499 = vld [vmem:[%s1 + $0xb4] sm:$0xf]
      %v500 = vld [vmem:[%s1 + $0xb8] sm:$0xf]
      %v501 = vld [vmem:[%s1 + $0xbc] sm:$0xf]
      %v502 = vld [vmem:[%s1 + $0xc0] sm:$0xf]
      %v503 = vld [vmem:[%s1 + $0xc4] sm:$0xf]
      %v504 = vld [vmem:[%s1 + $0xc8] sm:$0xf]
      %v505 = vld [vmem:[%s1 + $0xcc] sm:$0xf]
      %v506 = vld [vmem:[%s1 + $0xd0] sm:$0xf]
      %v507 = vld [vmem:[%s1 + $0xd4] sm:$0xf]
      %v508 = vld [vmem:[%s1 + $0xd8] sm:$0xf]
      %v509 = vld [vmem:[%s1 + $0xdc] sm:$0xf]
      %v510 = vld [vmem:[%s1 + $0xe0] sm:$0xf]
      %v511 = vld [vmem:[%s1 + $0xe4] sm:$0xf]
      %v512 = vld [vmem:[%s1 + $0xe8] sm:$0xf]
      %v513 = vld [vmem:[%s1 + $0xec] sm:$0xf]
      %v514 = vld [vmem:[%s1 + $0xf0] sm:$0xf]
      %v515 = vld [vmem:[%s1 + $0xf4] sm:$0xf]
      %v516 = vld [vmem:[%s1 + $0xf8] sm:$0xf]
      %v517 = vld [vmem:[%s1 + $0xfc] sm:$0xf]
      %v518 = vld [vmem:[%s1 + $0x100] sm:$0xf]
      %v519 = vld [vmem:[%s1 + $0x104] sm:$0xf]
      %v520 = vld [vmem:[%s1 + $0x108] sm:$0xf]
      %v521 = vld [vmem:[%s1 + $0x10c] sm:$0xf]
      %v522 = vld [vmem:[%s1 + $0x110] sm:$0xf]
      %v523 = vld [vmem:[%s1 + $0x114] sm:$0xf]
      %v524 = vld [vmem:[%s1 + $0x118] sm:$0xf]
      %v525 = vld [vmem:[%s1 + $0x11c] sm:$0xf]
      %v526 = vld [vmem:[%s1 + $0x120] sm:$0xf]
      %v527 = vld [vmem:[%s1 + $0x124] sm:$0xf]
      %v528 = vld [vmem:[%s1 + $0x128] sm:$0xf]
      %v529 = vld [vmem:[%s1 + $0x12c] sm:$0xf]
      %v530 = vld [vmem:[%s1 + $0x130] sm:$0xf]
      %v531 = vld [vmem:[%s1 + $0x134] sm:$0xf]
      %v532 = vld [vmem:[%s1 + $0x138] sm:$0xf]
      %v533 = vld [vmem:[%s1 + $0x13c] sm:$0xf]
      %v534 = vld [vmem:[%s1 + $0x140] sm:$0xf]
      %v535 = vld [vmem:[%s1 + $0x144] sm:$0xf]
      %v536 = vld [vmem:[%s1 + $0x148] sm:$0xf]
      %v537 = vld [vmem:[%s1 + $0x14c] sm:$0xf]
      %v538 = vld [vmem:[%s1 + $0x150] sm:$0xf]
      %v539 = vld [vmem:[%s1 + $0x154] sm:$0xf]
      %v540 = vld [vmem:[%s1 + $0x158] sm:$0xf]
      %v541 = vld [vmem:[%s1 + $0x15c] sm:$0xf]
      %v542 = vld [vmem:[%s1 + $0x160] sm:$0xf]
      %v543 = vld [vmem:[%s1 + $0x164] sm:$0xf]
      %v544 = vld [vmem:[%s1 + $0x168] sm:$0xf]
      %v545 = vld [vmem:[%s1 + $0x16c] sm:$0xf]
      %v546 = vld [vmem:[%s1 + $0x170] sm:$0xf]
      %v547 = vld [vmem:[%s1 + $0x174] sm:$0xf]
      %v548 = vld [vmem:[%s1 + $0x178] sm:$0xf]
      %v549 = vld [vmem:[%s1 + $0x17c] sm:$0xf]
      %v550 = vld [vmem:[%s2] sm:$0x1]
      %v552 = vlaneseq
      %v553 = vshrl.u32 %v552, 7
      %v554 = vsub.s32 0, %v553
      %v555 = vrot.slane %v550, %v554
      %v563 = vunpack.c.l.b16 %v448
      %v564 = vunpack.c.h.b16 %v448
      %v565 = vunpack.c.l.b16 %v449
      %v566 = vunpack.c.h.b16 %v449
      %v567 = vunpack.c.l.b16 %v450
      %v568 = vunpack.c.h.b16 %v450
      %v569 = vunpack.c.l.b16 %v451
      %v570 = vunpack.c.h.b16 %v451
      %v571 = vunpack.c.l.b16 %v452
      %v572 = vunpack.c.h.b16 %v452
      %v573 = vunpack.c.l.b16 %v453
      %v574 = vunpack.c.h.b16 %v453
      %v575 = vpack.c.b16 %v569, %v563
      %v576 = vpack.c.b16 %v570, %v564
      %v577 = vpack.c.b16 %v571, %v565
      %v578 = vpack.c.b16 %v572, %v566
      %v579 = vpack.c.b16 %v573, %v567
      %v580 = vpack.c.b16 %v574, %v568
      %v683 = vunpack.c.l.b16 %v454
      %v684 = vunpack.c.l.b16 %v455
      %v685 = vunpack.c.l.b16 %v456
      %v686 = vunpack.c.l.b16 %v457
      %v687 = vunpack.c.l.b16 %v458
      %v688 = vunpack.c.l.b16 %v459
      %v689 = vunpack.c.l.b16 %v460
      %v690 = vunpack.c.l.b16 %v461
      %v691 = vunpack.c.l.b16 %v462
      %v692 = vunpack.c.l.b16 %v463
      %v693 = vunpack.c.l.b16 %v464
      %v694 = vunpack.c.l.b16 %v465
      %v695 = vunpack.c.l.b16 %v466
      %v696 = vunpack.c.l.b16 %v467
      %v697 = vunpack.c.l.b16 %v468
      %v698 = vunpack.c.l.b16 %v469
      %v699 = vunpack.c.l.b16 %v470
      %v700 = vunpack.c.l.b16 %v471
      %v701 = vunpack.c.l.b16 %v472
      %v702 = vunpack.c.l.b16 %v473
      %v703 = vunpack.c.l.b16 %v474
      %v704 = vunpack.c.l.b16 %v475
      %v705 = vunpack.c.l.b16 %v476
      %v706 = vunpack.c.l.b16 %v477
      %v707 = vunpack.c.l.b16 %v478
      %v708 = vunpack.c.l.b16 %v479
      %v709 = vunpack.c.l.b16 %v480
      %v710 = vunpack.c.l.b16 %v481
      %v711 = vunpack.c.l.b16 %v482
      %v712 = vunpack.c.l.b16 %v483
      %v713 = vunpack.c.l.b16 %v484
      %v714 = vunpack.c.l.b16 %v485
      %v715 = vunpack.c.l.b16 %v486
      %v716 = vunpack.c.l.b16 %v487
      %v717 = vunpack.c.l.b16 %v488
      %v718 = vunpack.c.l.b16 %v489
      %v719 = vunpack.c.l.b16 %v490
      %v720 = vunpack.c.l.b16 %v491
      %v721 = vunpack.c.l.b16 %v492
      %v722 = vunpack.c.l.b16 %v493
      %v723 = vunpack.c.l.b16 %v494
      %v724 = vunpack.c.l.b16 %v495
      %v725 = vunpack.c.l.b16 %v496
      %v726 = vunpack.c.l.b16 %v497
      %v727 = vunpack.c.l.b16 %v498
      %v728 = vunpack.c.l.b16 %v499
      %v729 = vunpack.c.l.b16 %v500
      %v730 = vunpack.c.l.b16 %v501
      %v731 = vunpack.c.l.b16 %v502
      %v732 = vunpack.c.l.b16 %v503
      %v733 = vunpack.c.l.b16 %v504
      %v734 = vunpack.c.l.b16 %v505
      %v735 = vunpack.c.l.b16 %v506
      %v736 = vunpack.c.l.b16 %v507
      %v737 = vunpack.c.l.b16 %v508
      %v738 = vunpack.c.l.b16 %v509
      %v739 = vunpack.c.l.b16 %v510
      %v740 = vunpack.c.l.b16 %v511
      %v741 = vunpack.c.l.b16 %v512
      %v742 = vunpack.c.l.b16 %v513
      %v743 = vunpack.c.l.b16 %v514
      %v744 = vunpack.c.l.b16 %v515
      %v745 = vunpack.c.l.b16 %v516
      %v746 = vunpack.c.l.b16 %v517
      %v747 = vunpack.c.l.b16 %v518
      %v748 = vunpack.c.l.b16 %v519
      %v749 = vunpack.c.l.b16 %v520
      %v750 = vunpack.c.l.b16 %v521
      %v751 = vunpack.c.l.b16 %v522
      %v752 = vunpack.c.l.b16 %v523
      %v753 = vunpack.c.l.b16 %v524
      %v754 = vunpack.c.l.b16 %v525
      %v755 = vunpack.c.l.b16 %v526
      %v756 = vunpack.c.l.b16 %v527
      %v757 = vunpack.c.l.b16 %v528
      %v758 = vunpack.c.l.b16 %v529
      %v759 = vunpack.c.l.b16 %v530
      %v760 = vunpack.c.l.b16 %v531
      %v761 = vunpack.c.l.b16 %v532
      %v762 = vunpack.c.l.b16 %v533
      %v763 = vunpack.c.l.b16 %v534
      %v764 = vunpack.c.l.b16 %v535
      %v765 = vunpack.c.l.b16 %v536
      %v766 = vunpack.c.l.b16 %v537
      %v767 = vunpack.c.l.b16 %v538
      %v768 = vunpack.c.l.b16 %v539
      %v769 = vunpack.c.l.b16 %v540
      %v770 = vunpack.c.l.b16 %v541
      %v771 = vunpack.c.l.b16 %v542
      %v772 = vunpack.c.l.b16 %v543
      %v773 = vunpack.c.l.b16 %v544
      %v774 = vunpack.c.l.b16 %v545
      %v775 = vunpack.c.l.b16 %v546
      %v776 = vunpack.c.l.b16 %v547
      %v777 = vunpack.c.l.b16 %v548
      %v778 = vunpack.c.l.b16 %v549
      %v779 = vpack.c.b16 %v684, %v683
      %v780 = vpack.c.b16 %v686, %v685
      %v781 = vpack.c.b16 %v688, %v687
      %v782 = vpack.c.b16 %v690, %v689
      %v783 = vpack.c.b16 %v692, %v691
      %v784 = vpack.c.b16 %v694, %v693
      %v785 = vpack.c.b16 %v696, %v695
      %v786 = vpack.c.b16 %v698, %v697
      %v787 = vpack.c.b16 %v700, %v699
      %v788 = vpack.c.b16 %v702, %v701
      %v789 = vpack.c.b16 %v704, %v703
      %v790 = vpack.c.b16 %v706, %v705
      %v791 = vpack.c.b16 %v708, %v707
      %v792 = vpack.c.b16 %v710, %v709
      %v793 = vpack.c.b16 %v712, %v711
      %v794 = vpack.c.b16 %v714, %v713
      %v795 = vpack.c.b16 %v716, %v715
      %v796 = vpack.c.b16 %v718, %v717
      %v797 = vpack.c.b16 %v720, %v719
      %v798 = vpack.c.b16 %v722, %v721
      %v799 = vpack.c.b16 %v724, %v723
      %v800 = vpack.c.b16 %v726, %v725
      %v801 = vpack.c.b16 %v728, %v727
      %v802 = vpack.c.b16 %v730, %v729
      %v803 = vpack.c.b16 %v732, %v731
      %v804 = vpack.c.b16 %v734, %v733
      %v805 = vpack.c.b16 %v736, %v735
      %v806 = vpack.c.b16 %v738, %v737
      %v807 = vpack.c.b16 %v740, %v739
      %v808 = vpack.c.b16 %v742, %v741
      %v809 = vpack.c.b16 %v744, %v743
      %v810 = vpack.c.b16 %v746, %v745
      %v811 = vpack.c.b16 %v748, %v747
      %v812 = vpack.c.b16 %v750, %v749
      %v813 = vpack.c.b16 %v752, %v751
      %v814 = vpack.c.b16 %v754, %v753
      %v815 = vpack.c.b16 %v756, %v755
      %v816 = vpack.c.b16 %v758, %v757
      %v817 = vpack.c.b16 %v760, %v759
      %v818 = vpack.c.b16 %v762, %v761
      %v819 = vpack.c.b16 %v764, %v763
      %v820 = vpack.c.b16 %v766, %v765
      %v821 = vpack.c.b16 %v768, %v767
      %v822 = vpack.c.b16 %v770, %v769
      %v823 = vpack.c.b16 %v772, %v771
      %v824 = vpack.c.b16 %v774, %v773
      %v825 = vpack.c.b16 %v776, %v775
      %v826 = vpack.c.b16 %v778, %v777
      %875 = vmatprep.subr.bf16.mxu0 0
      %876 = vmatpush1.bf16.msra.mxu0 %v779
      %877 = vmatprep.subr.bf16.mxu0 0
      %878 = vmatpush1.bf16.msra.mxu0 %v780
      %879 = vmatprep.subr.bf16.mxu0 0
      %880 = vmatpush1.bf16.msra.mxu0 %v781
      %881 = vmatprep.subr.bf16.mxu0 0
      %882 = vmatpush1.bf16.msra.mxu0 %v782
      %883 = vmatprep.subr.bf16.mxu0 0
      %884 = vmatpush1.bf16.msra.mxu0 %v783
      %885 = vmatprep.subr.bf16.mxu0 0
      %886 = vmatpush1.bf16.msra.mxu0 %v784
      %887 = vmatprep.subr.bf16.mxu0 0
      %888 = vmatpush1.bf16.msra.mxu0 %v785
      %889 = vmatprep.subr.bf16.mxu0 0
      %890 = vmatpush1.bf16.msra.mxu0 %v786
      %891 = vmatprep.subr.bf16.mxu0 0
      %892 = vmatpush1.bf16.msra.mxu0 %v787
      %893 = vmatprep.subr.bf16.mxu0 0
      %894 = vmatpush1.bf16.msra.mxu0 %v788
      %895 = vmatprep.subr.bf16.mxu0 0
      %896 = vmatpush1.bf16.msra.mxu0 %v789
      %897 = vmatprep.subr.bf16.mxu0 0
      %898 = vmatpush1.bf16.msra.mxu0 %v790
      %899 = vmatprep.subr.bf16.mxu0 0
      %900 = vmatpush1.bf16.msra.mxu0 %v791
      %901 = vmatprep.subr.bf16.mxu0 0
      %902 = vmatpush1.bf16.msra.mxu0 %v792
      %903 = vmatprep.subr.bf16.mxu0 0
      %904 = vmatpush1.bf16.msra.mxu0 %v793
      %905 = vmatprep.subr.bf16.mxu0 0
      %906 = vmatpush1.bf16.msra.mxu0 %v794
      %907 = vmatprep.mubr.bf16.mxu0 %v576
      %908 = vmatmul.mubr.bf16.gmra.mrb[0].mxu0 %v575
      %v909 = vpop.f32.mrb[0].mxu0
      %v910 = vadd.f32 %v555, %v909
      %v911 = vpop.f32.mrb[0].mxu0
      %v912 = vpop.f32.mrb[0].mxu0
      %v913 = vadd.f32 %v555, %v912
      %v914 = vpop.f32.mrb[0].mxu0
      %915 = vdwg.mxu0
      %916 = vmatprep.subr.bf16.mxu0 0
      %917 = vmatpush1.bf16.msra.mxu0 %v795
      %918 = vmatprep.subr.bf16.mxu0 0
      %919 = vmatpush1.bf16.msra.mxu0 %v796
      %920 = vmatprep.subr.bf16.mxu0 0
      %921 = vmatpush1.bf16.msra.mxu0 %v797
      %922 = vmatprep.subr.bf16.mxu0 0
      %923 = vmatpush1.bf16.msra.mxu0 %v798
      %924 = vmatprep.subr.bf16.mxu0 0
      %925 = vmatpush1.bf16.msra.mxu0 %v799
      %926 = vmatprep.subr.bf16.mxu0 0
      %927 = vmatpush1.bf16.msra.mxu0 %v800
      %928 = vmatprep.subr.bf16.mxu0 0
      %929 = vmatpush1.bf16.msra.mxu0 %v801
      %930 = vmatprep.subr.bf16.mxu0 0
      %931 = vmatpush1.bf16.msra.mxu0 %v802
      %932 = vmatprep.subr.bf16.mxu0 0
      %933 = vmatpush1.bf16.msra.mxu0 %v803
      %934 = vmatprep.subr.bf16.mxu0 0
      %935 = vmatpush1.bf16.msra.mxu0 %v804
      %936 = vmatprep.subr.bf16.mxu0 0
      %937 = vmatpush1.bf16.msra.mxu0 %v805
      %938 = vmatprep.subr.bf16.mxu0 0
      %939 = vmatpush1.bf16.msra.mxu0 %v806
      %940 = vmatprep.subr.bf16.mxu0 0
      %941 = vmatpush1.bf16.msra.mxu0 %v807
      %942 = vmatprep.subr.bf16.mxu0 0
      %943 = vmatpush1.bf16.msra.mxu0 %v808
      %944 = vmatprep.subr.bf16.mxu0 0
      %945 = vmatpush1.bf16.msra.mxu0 %v809
      %946 = vmatprep.subr.bf16.mxu0 0
      %947 = vmatpush1.bf16.msra.mxu0 %v810
      %948 = vmatprep.mubr.bf16.mxu0 %v578
      %949 = vmatmul.mubr.bf16.gmra.mrb[0].mxu0 %v577
      %v950 = vpop.f32.mrb[0].mxu0
      %v951 = vadd.f32 %v910, %v950
      %v952 = vpop.f32.mrb[0].mxu0
      %v953 = vpop.f32.mrb[0].mxu0
      %v954 = vadd.f32 %v913, %v953
      %v955 = vpop.f32.mrb[0].mxu0
      %956 = vdwg.mxu0
      %957 = vmatprep.subr.bf16.mxu0 0
      %958 = vmatpush1.bf16.msra.mxu0 %v811
      %959 = vmatprep.subr.bf16.mxu0 0
      %960 = vmatpush1.bf16.msra.mxu0 %v812
      %961 = vmatprep.subr.bf16.mxu0 0
      %962 = vmatpush1.bf16.msra.mxu0 %v813
      %963 = vmatprep.subr.bf16.mxu0 0
      %964 = vmatpush1.bf16.msra.mxu0 %v814
      %965 = vmatprep.subr.bf16.mxu0 0
      %966 = vmatpush1.bf16.msra.mxu0 %v815
      %967 = vmatprep.subr.bf16.mxu0 0
      %968 = vmatpush1.bf16.msra.mxu0 %v816
      %969 = vmatprep.subr.bf16.mxu0 0
      %970 = vmatpush1.bf16.msra.mxu0 %v817
      %971 = vmatprep.subr.bf16.mxu0 0
      %972 = vmatpush1.bf16.msra.mxu0 %v818
      %973 = vmatprep.subr.bf16.mxu0 0
      %974 = vmatpush1.bf16.msra.mxu0 %v819
      %975 = vmatprep.subr.bf16.mxu0 0
      %976 = vmatpush1.bf16.msra.mxu0 %v820
      %977 = vmatprep.subr.bf16.mxu0 0
      %978 = vmatpush1.bf16.msra.mxu0 %v821
      %979 = vmatprep.subr.bf16.mxu0 0
      %980 = vmatpush1.bf16.msra.mxu0 %v822
      %981 = vmatprep.subr.bf16.mxu0 0
      %982 = vmatpush1.bf16.msra.mxu0 %v823
      %983 = vmatprep.subr.bf16.mxu0 0
      %984 = vmatpush1.bf16.msra.mxu0 %v824
      %985 = vmatprep.subr.bf16.mxu0 0
      %986 = vmatpush1.bf16.msra.mxu0 %v825
      %987 = vmatprep.subr.bf16.mxu0 0
      %988 = vmatpush1.bf16.msra.mxu0 %v826
      %989 = vmatprep.mubr.bf16.mxu0 %v580
      %990 = vmatmul.mubr.bf16.gmra.mrb[0].mxu0 %v579
      %v991 = vpop.f32.mrb[0].mxu0
      %v992 = vadd.f32 %v951, %v991
      %v993 = vpop.f32.mrb[0].mxu0
      %v994 = vpop.f32.mrb[0].mxu0
      %v995 = vadd.f32 %v954, %v994
      %v996 = vpop.f32.mrb[0].mxu0
      %997 = vdwg.mxu0
      %vm998 = vcmp.gt.f32.partialorder %v992, 0.0
      %vm999 = vcmp.gt.f32.partialorder %v995, 0.0
      %v1000 = vmin.f32 %v992, 0.0
      %v1001 = vmin.f32 %v995, 0.0
      %v1002 = vmul.f32 %v1000, 1.442695
      %v1003 = vpow.pop %v1002
      %v1004 = vmul.f32 %v1001, 1.442695
      %v1005 = vpow.pop %v1004
      %v1006 = vsub.f32 %v1003, 1.0
      %v1007 = vsub.f32 %v1005, 1.0
      %v1008 = vsel %vm998, %v992, %v1006
      %v1009 = vsel %vm999, %v995, %v1007
      %v1010 = vpack.c.bf16 %v1009, %v1008
      %v1011 = vld [vmem:[%s3] sm:$0xf]
      %v1012 = vld [vmem:[%s3 + $0x4] sm:$0xf]
      %v1013 = vld [vmem:[%s3 + $0x8] sm:$0xf]
      %v1014 = vld [vmem:[%s3 + $0xc] sm:$0xf]
      %v1015 = vld [vmem:[%s3 + $0x10] sm:$0xf]
      %v1016 = vld [vmem:[%s3 + $0x14] sm:$0xf]
      %v1017 = vld [vmem:[%s3 + $0x18] sm:$0xf]
      %v1018 = vld [vmem:[%s3 + $0x1c] sm:$0xf]
      %v1019 = vld [vmem:[%s3 + $0x20] sm:$0xf]
      %v1020 = vld [vmem:[%s3 + $0x24] sm:$0xf]
      %v1021 = vld [vmem:[%s3 + $0x28] sm:$0xf]
      %v1022 = vld [vmem:[%s3 + $0x2c] sm:$0xf]
      %v1023 = vld [vmem:[%s3 + $0x30] sm:$0xf]
      %v1024 = vld [vmem:[%s3 + $0x34] sm:$0xf]
      %v1025 = vld [vmem:[%s3 + $0x38] sm:$0xf]
      %v1026 = vld [vmem:[%s3 + $0x3c] sm:$0xf]
      %v1027 = vld [vmem:[%s4] sm:$0x1]
      %v1029 = vlaneseq
      %v1030 = vshrl.u32 %v1029, 7
      %v1031 = vsub.s32 0, %v1030
      %v1032 = vrot.slane %v1027, %v1031
      %v1050 = vunpack.c.l.b16 %v1011
      %v1051 = vunpack.c.l.b16 %v1012
      %v1052 = vunpack.c.l.b16 %v1013
      %v1053 = vunpack.c.l.b16 %v1014
      %v1054 = vunpack.c.l.b16 %v1015
      %v1055 = vunpack.c.l.b16 %v1016
      %v1056 = vunpack.c.l.b16 %v1017
      %v1057 = vunpack.c.l.b16 %v1018
      %v1058 = vunpack.c.l.b16 %v1019
      %v1059 = vunpack.c.l.b16 %v1020
      %v1060 = vunpack.c.l.b16 %v1021
      %v1061 = vunpack.c.l.b16 %v1022
      %v1062 = vunpack.c.l.b16 %v1023
      %v1063 = vunpack.c.l.b16 %v1024
      %v1064 = vunpack.c.l.b16 %v1025
      %v1065 = vunpack.c.l.b16 %v1026
      %v1066 = vpack.c.b16 %v1051, %v1050
      %v1067 = vpack.c.b16 %v1053, %v1052
      %v1068 = vpack.c.b16 %v1055, %v1054
      %v1069 = vpack.c.b16 %v1057, %v1056
      %v1070 = vpack.c.b16 %v1059, %v1058
      %v1071 = vpack.c.b16 %v1061, %v1060
      %v1072 = vpack.c.b16 %v1063, %v1062
      %v1073 = vpack.c.b16 %v1065, %v1064
      %1082 = vmatprep.subr.bf16.mxu0 0
      %1083 = vmatpush1.bf16.msra.mxu0 %v1066
      %1084 = vmatprep.subr.bf16.mxu0 0
      %1085 = vmatpush1.bf16.msra.mxu0 %v1067
      %1086 = vmatprep.subr.bf16.mxu0 0
      %1087 = vmatpush1.bf16.msra.mxu0 %v1068
      %1088 = vmatprep.subr.bf16.mxu0 0
      %1089 = vmatpush1.bf16.msra.mxu0 %v1069
      %1090 = vmatprep.subr.bf16.mxu0 0
      %1091 = vmatpush1.bf16.msra.mxu0 %v1070
      %1092 = vmatprep.subr.bf16.mxu0 0
      %1093 = vmatpush1.bf16.msra.mxu0 %v1071
      %1094 = vmatprep.subr.bf16.mxu0 0
      %1095 = vmatpush1.bf16.msra.mxu0 %v1072
      %1096 = vmatprep.subr.bf16.mxu0 0
      %1097 = vmatpush1.bf16.msra.mxu0 %v1073
      %1098 = vmatprep.subr.bf16.mxu0 0
      %1099 = vmatpush1.bf16.msra.mxu0 0
      %1100 = vmatprep.subr.bf16.mxu0 0
      %1101 = vmatpush1.bf16.msra.mxu0 0
      %1102 = vmatprep.subr.bf16.mxu0 0
      %1103 = vmatpush1.bf16.msra.mxu0 0
      %1104 = vmatprep.subr.bf16.mxu0 0
      %1105 = vmatpush1.bf16.msra.mxu0 0
      %1106 = vmatprep.subr.bf16.mxu0 0
      %1107 = vmatpush1.bf16.msra.mxu0 0
      %1108 = vmatprep.subr.bf16.mxu0 0
      %1109 = vmatpush1.bf16.msra.mxu0 0
      %1110 = vmatprep.subr.bf16.mxu0 0
      %1111 = vmatpush1.bf16.msra.mxu0 0
      %1112 = vmatprep.subr.bf16.mxu0 0
      %1113 = vmatpush1.bf16.msra.mxu0 0
      %1114 = vmatprep.mubr.bf16.mxu0 0
      %1115 = vmatmul.mubr.bf16.gmra.mrb[0].mxu0 %v1010
      %v1116 = vpop.f32.mrb[0].mxu0
      %v1117 = vadd.f32 %v1032, %v1116
      %v1118 = vpop.f32.mrb[0].mxu0
      %v1119 = vpop.f32.mrb[0].mxu0
      %v1120 = vadd.f32 %v1032, %v1119
      %v1121 = vpop.f32.mrb[0].mxu0
      %1122 = vdwg.mxu0
      %vm1123 = vcmp.gt.f32.partialorder %v1117, 0.0
      %vm1124 = vcmp.gt.f32.partialorder %v1120, 0.0
      %v1125 = vmin.f32 %v1117, 0.0
      %v1126 = vmin.f32 %v1120, 0.0
      %v1127 = vmul.f32 %v1125, 1.442695
      %v1128 = vpow.pop %v1127
      %v1129 = vmul.f32 %v1126, 1.442695
      %v1130 = vpow.pop %v1129
      %v1131 = vsub.f32 %v1128, 1.0
      %v1132 = vsub.f32 %v1130, 1.0
      %v1133 = vsel %vm1123, %v1117, %v1131
      %v1134 = vsel %vm1124, %v1120, %v1132
      %v1135 = vpack.c.bf16 %v1134, %v1133
      %v1136 = vld [vmem:[%s5] sm:$0xf]
      %v1137 = vld [vmem:[%s5 + $0x4] sm:$0xf]
      %v1138 = vld [vmem:[%s5 + $0x8] sm:$0xf]
      %v1139 = vld [vmem:[%s5 + $0xc] sm:$0xf]
      %v1140 = vld [vmem:[%s5 + $0x10] sm:$0xf]
      %v1141 = vld [vmem:[%s5 + $0x14] sm:$0xf]
      %v1142 = vld [vmem:[%s5 + $0x18] sm:$0xf]
      %v1143 = vld [vmem:[%s5 + $0x1c] sm:$0xf]
      %v1144 = vld [vmem:[%s6] sm:$0x1]
      %v1146 = vlaneseq
      %v1147 = vshrl.u32 %v1146, 7
      %v1148 = vsub.s32 0, %v1147
      %v1149 = vrot.slane %v1144, %v1148
      %v1159 = vunpack.c.l.b16 %v1136
      %v1160 = vunpack.c.l.b16 %v1137
      %v1161 = vunpack.c.l.b16 %v1138
      %v1162 = vunpack.c.l.b16 %v1139
      %v1163 = vunpack.c.l.b16 %v1140
      %v1164 = vunpack.c.l.b16 %v1141
      %v1165 = vunpack.c.l.b16 %v1142
      %v1166 = vunpack.c.l.b16 %v1143
      %v1167 = vpack.c.b16 %v1160, %v1159
      %v1168 = vpack.c.b16 %v1162, %v1161
      %v1169 = vpack.c.b16 %v1164, %v1163
      %v1170 = vpack.c.b16 %v1166, %v1165
      %vm1175 = vcmask 523264
      %v1177 = vsel %vm1175, %v1135, 0
      %1179 = vmatprep.subr.bf16.mxu0 0
      %1180 = vmatpush1.bf16.msra.mxu0 %v1167
      %1181 = vmatprep.subr.bf16.mxu0 0
      %1182 = vmatpush1.bf16.msra.mxu0 %v1168
      %1183 = vmatprep.subr.bf16.mxu0 0
      %1184 = vmatpush1.bf16.msra.mxu0 %v1169
      %1185 = vmatprep.subr.bf16.mxu0 0
      %1186 = vmatpush1.bf16.msra.mxu0 %v1170
      %1187 = vmatprep.subr.bf16.mxu0 0
      %1188 = vmatpush1.bf16.msra.mxu0 0
      %1189 = vmatprep.subr.bf16.mxu0 0
      %1190 = vmatpush1.bf16.msra.mxu0 0
      %1191 = vmatprep.subr.bf16.mxu0 0
      %1192 = vmatpush1.bf16.msra.mxu0 0
      %1193 = vmatprep.subr.bf16.mxu0 0
      %1194 = vmatpush1.bf16.msra.mxu0 0
      %1195 = vmatprep.subr.bf16.mxu0 0
      %1196 = vmatpush1.bf16.msra.mxu0 0
      %1197 = vmatprep.subr.bf16.mxu0 0
      %1198 = vmatpush1.bf16.msra.mxu0 0
      %1199 = vmatprep.subr.bf16.mxu0 0
      %1200 = vmatpush1.bf16.msra.mxu0 0
      %1201 = vmatprep.subr.bf16.mxu0 0
      %1202 = vmatpush1.bf16.msra.mxu0 0
      %1203 = vmatprep.subr.bf16.mxu0 0
      %1204 = vmatpush1.bf16.msra.mxu0 0
      %1205 = vmatprep.subr.bf16.mxu0 0
      %1206 = vmatpush1.bf16.msra.mxu0 0
      %1207 = vmatprep.subr.bf16.mxu0 0
      %1208 = vmatpush1.bf16.msra.mxu0 0
      %1209 = vmatprep.subr.bf16.mxu0 0
      %1210 = vmatpush1.bf16.msra.mxu0 0
      %1211 = vmatprep.mubr.bf16.mxu0 0
      %1212 = vmatmul.mubr.bf16.gmra.mrb[0].mxu0 %v1177
      %v1213 = vpop.f32.mrb[0].mxu0
      %v1214 = vadd.f32 %v1149, %v1213
      %v1215 = vpop.f32.mrb[0].mxu0
      %v1216 = vpop.f32.mrb[0].mxu0
      %v1217 = vadd.f32 %v1149, %v1216
      %v1218 = vpop.f32.mrb[0].mxu0
      %1219 = vdwg.mxu0
      %vm1220 = vcmp.gt.f32.partialorder %v1214, 0.0
      %vm1221 = vcmp.gt.f32.partialorder %v1217, 0.0
      %v1222 = vmin.f32 %v1214, 0.0
      %v1223 = vmin.f32 %v1217, 0.0
      %v1224 = vmul.f32 %v1222, 1.442695
      %v1225 = vpow.pop %v1224
      %v1226 = vmul.f32 %v1223, 1.442695
      %v1227 = vpow.pop %v1226
      %v1228 = vsub.f32 %v1225, 1.0
      %v1229 = vsub.f32 %v1227, 1.0
      %v1230 = vsel %vm1220, %v1214, %v1228
      %v1231 = vsel %vm1221, %v1217, %v1229
      %v1232 = vpack.c.bf16 %v1231, %v1230
      %v1233 = vld [vmem:[%s7] sm:$0xf]
      %v1234 = vld [vmem:[%s7 + $0x4] sm:$0xf]
      %v1235 = vld [vmem:[%s7 + $0x8] sm:$0xf]
      %v1236 = vld [vmem:[%s7 + $0xc] sm:$0xf]
      %v1237 = vld [vmem:[%s8] sm:$0x1]
      %v1239 = vlaneseq
      %v1240 = vshrl.u32 %v1239, 7
      %v1241 = vsub.s32 0, %v1240
      %v1242 = vrot.slane %v1237, %v1241
      %v1248 = vunpack.c.l.b16 %v1233
      %v1249 = vunpack.c.l.b16 %v1234
      %v1250 = vunpack.c.l.b16 %v1235
      %v1251 = vunpack.c.l.b16 %v1236
      %v1252 = vpack.c.b16 %v1249, %v1248
      %v1253 = vpack.c.b16 %v1251, %v1250
      %vm1256 = vcmask 261120
      %v1258 = vsel %vm1256, %v1232, 0
      %1260 = vmatprep.subr.bf16.mxu0 0
      %1261 = vmatpush1.bf16.msra.mxu0 %v1252
      %1262 = vmatprep.subr.bf16.mxu0 0
      %1263 = vmatpush1.bf16.msra.mxu0 %v1253
      %1264 = vmatprep.subr.bf16.mxu0 0
      %1265 = vmatpush1.bf16.msra.mxu0 0
      %1266 = vmatprep.subr.bf16.mxu0 0
      %1267 = vmatpush1.bf16.msra.mxu0 0
      %1268 = vmatprep.subr.bf16.mxu0 0
      %1269 = vmatpush1.bf16.msra.mxu0 0
      %1270 = vmatprep.subr.bf16.mxu0 0
      %1271 = vmatpush1.bf16.msra.mxu0 0
      %1272 = vmatprep.subr.bf16.mxu0 0
      %1273 = vmatpush1.bf16.msra.mxu0 0
      %1274 = vmatprep.subr.bf16.mxu0 0
      %1275 = vmatpush1.bf16.msra.mxu0 0
      %1276 = vmatprep.subr.bf16.mxu0 0
      %1277 = vmatpush1.bf16.msra.mxu0 0
      %1278 = vmatprep.subr.bf16.mxu0 0
      %1279 = vmatpush1.bf16.msra.mxu0 0
      %1280 = vmatprep.subr.bf16.mxu0 0
      %1281 = vmatpush1.bf16.msra.mxu0 0
      %1282 = vmatprep.subr.bf16.mxu0 0
      %1283 = vmatpush1.bf16.msra.mxu0 0
      %1284 = vmatprep.subr.bf16.mxu0 0
      %1285 = vmatpush1.bf16.msra.mxu0 0
      %1286 = vmatprep.subr.bf16.mxu0 0
      %1287 = vmatpush1.bf16.msra.mxu0 0
      %1288 = vmatprep.subr.bf16.mxu0 0
      %1289 = vmatpush1.bf16.msra.mxu0 0
      %1290 = vmatprep.subr.bf16.mxu0 0
      %1291 = vmatpush1.bf16.msra.mxu0 0
      %1292 = vmatprep.mubr.bf16.mxu0 0
      %1293 = vmatmul.mubr.bf16.gmra.mrb[0].mxu0 %v1258
      %v1294 = vpop.f32.mrb[0].mxu0
      %v1295 = vadd.f32 %v1242, %v1294
      %v1296 = vpop.f32.mrb[0].mxu0
      %v1297 = vpop.f32.mrb[0].mxu0
      %v1298 = vadd.f32 %v1242, %v1297
      %v1299 = vpop.f32.mrb[0].mxu0
      %1300 = vdwg.mxu0
      %vm1301 = vcmp.gt.f32.partialorder %v1295, 0.0
      %vm1302 = vcmp.gt.f32.partialorder %v1298, 0.0
      %v1303 = vmin.f32 %v1295, 0.0
      %v1304 = vmin.f32 %v1298, 0.0
      %v1305 = vmul.f32 %v1303, 1.442695
      %v1306 = vpow.pop %v1305
      %v1307 = vmul.f32 %v1304, 1.442695
      %v1308 = vpow.pop %v1307
      %v1309 = vsub.f32 %v1306, 1.0
      %v1310 = vsub.f32 %v1308, 1.0
      %v1311 = vsel %vm1301, %v1295, %v1309
      %v1312 = vsel %vm1302, %v1298, %v1310
      %v1313 = vpack.c.bf16 %v1312, %v1311
      %v1314 = vld [vmem:[%s9] sm:$0xf]
      %v1315 = vld [vmem:[%s9 + $0x4] sm:$0xf]
      %v1316 = vld [vmem:[%s9 + $0x8] sm:$0xf]
      %v1317 = vld [vmem:[%s9 + $0xc] sm:$0xf]
      %v1318 = vld [vmem:[%s10] sm:$0x1]
      %v1320 = vlaneseq
      %v1321 = vshrl.u32 %v1320, 7
      %v1322 = vsub.s32 0, %v1321
      %v1323 = vrot.slane %v1318, %v1322
      %v1329 = vunpack.c.l.b16 %v1314
      %v1330 = vunpack.c.l.b16 %v1315
      %v1331 = vunpack.c.l.b16 %v1316
      %v1332 = vunpack.c.l.b16 %v1317
      %v1333 = vpack.c.b16 %v1330, %v1329
      %v1334 = vpack.c.b16 %v1332, %v1331
      %v1338 = vsel %vm1256, %v1313, 0
      %1340 = vmatprep.subr.bf16.mxu0 0
      %1341 = vmatpush1.bf16.msra.mxu0 %v1333
      %1342 = vmatprep.subr.bf16.mxu0 0
      %1343 = vmatpush1.bf16.msra.mxu0 %v1334
      %1344 = vmatprep.subr.bf16.mxu0 0
      %1345 = vmatpush1.bf16.msra.mxu0 0
      %1346 = vmatprep.subr.bf16.mxu0 0
      %1347 = vmatpush1.bf16.msra.mxu0 0
      %1348 = vmatprep.subr.bf16.mxu0 0
      %1349 = vmatpush1.bf16.msra.mxu0 0
      %1350 = vmatprep.subr.bf16.mxu0 0
      %1351 = vmatpush1.bf16.msra.mxu0 0
      %1352 = vmatprep.subr.bf16.mxu0 0
      %1353 = vmatpush1.bf16.msra.mxu0 0
      %1354 = vmatprep.subr.bf16.mxu0 0
      %1355 = vmatpush1.bf16.msra.mxu0 0
      %1356 = vmatprep.subr.bf16.mxu0 0
      %1357 = vmatpush1.bf16.msra.mxu0 0
      %1358 = vmatprep.subr.bf16.mxu0 0
      %1359 = vmatpush1.bf16.msra.mxu0 0
      %1360 = vmatprep.subr.bf16.mxu0 0
      %1361 = vmatpush1.bf16.msra.mxu0 0
      %1362 = vmatprep.subr.bf16.mxu0 0
      %1363 = vmatpush1.bf16.msra.mxu0 0
      %1364 = vmatprep.subr.bf16.mxu0 0
      %1365 = vmatpush1.bf16.msra.mxu0 0
      %1366 = vmatprep.subr.bf16.mxu0 0
      %1367 = vmatpush1.bf16.msra.mxu0 0
      %1368 = vmatprep.subr.bf16.mxu0 0
      %1369 = vmatpush1.bf16.msra.mxu0 0
      %1370 = vmatprep.subr.bf16.mxu0 0
      %1371 = vmatpush1.bf16.msra.mxu0 0
      %1372 = vmatprep.mubr.bf16.mxu0 0
      %1373 = vmatmul.mubr.bf16.gmra.mrb[0].mxu0 %v1338
      %v1374 = vpop.f32.mrb[0].mxu0
      %v1375 = vadd.f32 %v1323, %v1374
      %v1376 = vpop.f32.mrb[0].mxu0
      %v1377 = vpop.f32.mrb[0].mxu0
      %v1378 = vadd.f32 %v1323, %v1377
      %v1379 = vpop.f32.mrb[0].mxu0
      %1380 = vdwg.mxu0
      %vm1381 = vcmp.gt.f32.partialorder %v1375, 0.0
      %vm1382 = vcmp.gt.f32.partialorder %v1378, 0.0
      %v1383 = vmin.f32 %v1375, 0.0
      %v1384 = vmin.f32 %v1378, 0.0
      %v1385 = vmul.f32 %v1383, 1.442695
      %v1386 = vpow.pop %v1385
      %v1387 = vmul.f32 %v1384, 1.442695
      %v1388 = vpow.pop %v1387
      %v1389 = vsub.f32 %v1386, 1.0
      %v1390 = vsub.f32 %v1388, 1.0
      %v1391 = vsel %vm1381, %v1375, %v1389
      %v1392 = vsel %vm1382, %v1378, %v1390
      %v1393 = vadd.f32 %v1230, %v1391
      %v1394 = vadd.f32 %v1231, %v1392
      %v1395 = vpack.c.bf16 %v1394, %v1393
      %v1396 = vld [vmem:[%s11] sm:$0xf]
      %v1397 = vld [vmem:[%s11 + $0x4] sm:$0xf]
      %v1398 = vld [vmem:[%s11 + $0x8] sm:$0xf]
      %v1399 = vld [vmem:[%s11 + $0xc] sm:$0xf]
      %v1400 = vld [vmem:[%s12] sm:$0x1]
      %v1402 = vlaneseq
      %v1403 = vshrl.u32 %v1402, 7
      %v1404 = vsub.s32 0, %v1403
      %v1405 = vrot.slane %v1400, %v1404
      %v1411 = vunpack.c.l.b16 %v1396
      %v1412 = vunpack.c.l.b16 %v1397
      %v1413 = vunpack.c.l.b16 %v1398
      %v1414 = vunpack.c.l.b16 %v1399
      %v1415 = vpack.c.b16 %v1412, %v1411
      %v1416 = vpack.c.b16 %v1414, %v1413
      %v1420 = vsel %vm1256, %v1395, 0
      %1422 = vmatprep.subr.bf16.mxu0 0
      %1423 = vmatpush1.bf16.msra.mxu0 %v1415
      %1424 = vmatprep.subr.bf16.mxu0 0
      %1425 = vmatpush1.bf16.msra.mxu0 %v1416
      %1426 = vmatprep.subr.bf16.mxu0 0
      %1427 = vmatpush1.bf16.msra.mxu0 0
      %1428 = vmatprep.subr.bf16.mxu0 0
      %1429 = vmatpush1.bf16.msra.mxu0 0
      %1430 = vmatprep.subr.bf16.mxu0 0
      %1431 = vmatpush1.bf16.msra.mxu0 0
      %1432 = vmatprep.subr.bf16.mxu0 0
      %1433 = vmatpush1.bf16.msra.mxu0 0
      %1434 = vmatprep.subr.bf16.mxu0 0
      %1435 = vmatpush1.bf16.msra.mxu0 0
      %1436 = vmatprep.subr.bf16.mxu0 0
      %1437 = vmatpush1.bf16.msra.mxu0 0
      %1438 = vmatprep.subr.bf16.mxu0 0
      %1439 = vmatpush1.bf16.msra.mxu0 0
      %1440 = vmatprep.subr.bf16.mxu0 0
      %1441 = vmatpush1.bf16.msra.mxu0 0
      %1442 = vmatprep.subr.bf16.mxu0 0
      %1443 = vmatpush1.bf16.msra.mxu0 0
      %1444 = vmatprep.subr.bf16.mxu0 0
      %1445 = vmatpush1.bf16.msra.mxu0 0
      %1446 = vmatprep.subr.bf16.mxu0 0
      %1447 = vmatpush1.bf16.msra.mxu0 0
      %1448 = vmatprep.subr.bf16.mxu0 0
      %1449 = vmatpush1.bf16.msra.mxu0 0
      %1450 = vmatprep.subr.bf16.mxu0 0
      %1451 = vmatpush1.bf16.msra.mxu0 0
      %1452 = vmatprep.subr.bf16.mxu0 0
      %1453 = vmatpush1.bf16.msra.mxu0 0
      %1454 = vmatprep.mubr.bf16.mxu0 0
      %1455 = vmatmul.mubr.bf16.gmra.mrb[0].mxu0 %v1420
      %v1456 = vpop.f32.mrb[0].mxu0
      %v1457 = vadd.f32 %v1405, %v1456
      %v1458 = vpop.f32.mrb[0].mxu0
      %v1459 = vpop.f32.mrb[0].mxu0
      %v1460 = vadd.f32 %v1405, %v1459
      %v1461 = vpop.f32.mrb[0].mxu0
      %1462 = vdwg.mxu0
      %vm1463 = vcmp.gt.f32.partialorder %v1457, 0.0
      %vm1464 = vcmp.gt.f32.partialorder %v1460, 0.0
      %v1465 = vmin.f32 %v1457, 0.0
      %v1466 = vmin.f32 %v1460, 0.0
      %v1467 = vmul.f32 %v1465, 1.442695
      %v1468 = vpow.pop %v1467
      %v1469 = vmul.f32 %v1466, 1.442695
      %v1470 = vpow.pop %v1469
      %v1471 = vsub.f32 %v1468, 1.0
      %v1472 = vsub.f32 %v1470, 1.0
      %v1473 = vsel %vm1463, %v1457, %v1471
      %v1474 = vsel %vm1464, %v1460, %v1472
      %v1475 = vpack.c.bf16 %v1474, %v1473
      %v1477 = vunpack.c.l.b16 %v1475
      %v1478 = vunpack.c.h.b16 %v1475
      %v1479 = vpack.c.b16 %v1477, %v1477
      %v1480 = vpack.c.b16 %v1478, %v1478
      %1483 = vst [vmem:[%s445] sm:$0xf] %v1479
      %1484 = vst [vmem:[%s445 + $0x4] sm:$0xf] %v1480
      %s1485 = smul.u32 2, %s24
      %p1486 = scmp.lt.s32.totalorder %s1485, 3
      %s1487 = scalar_select %p1486, %s1485, 3
      %s1488 = smul.addr %s1487, 4
      %s1489 = scalar_lea.vmem %s13, %s1488
      // Predicated region
      $region73: #{autoencoder_classifier.1} parent=71 // pred_check
        %p1490 = pneg %p320
      $region74: #{autoencoder_classifier.1} parent=71 // pred_check_branch
        %1492 = sbr.rel (%p1490) target = $region76
      $region75: #{autoencoder_classifier.1} parent=71 // pred_region
        %s1493 = smul.u32 2, %s24
      $region76: #{autoencoder_classifier.1} parent=71 // pred_fallthru
        _
    $region72: #{autoencoder_classifier.1} parent=5 // pred_fallthru
      _
    %p1494 = scmp.le.s32.totalorder 2, %s19
    // Predicated region
    $region77: #{autoencoder_classifier.1} parent=5 // pred_check
      %p1495 = pneg %p1494
    $region78: #{autoencoder_classifier.1} parent=5 // pred_check_branch
      %1497 = sbr.rel (%p1495) target = $region80
    $region79: #{autoencoder_classifier.1} parent=5 // pred_region
      %s1498 = ssub.s32 %s19, 2
      // Predicated region
      $region81: #{autoencoder_classifier.1} parent=79 // pred_check
        %p1499 = pneg %p326
      $region82: #{autoencoder_classifier.1} parent=79 // pred_check_branch
        %1501 = sbr.rel (%p1499) target = $region84
      $region83: #{autoencoder_classifier.1} parent=79 // pred_region
        %s1502 = smul.u32 2, %s25
        %p1503 = scmp.lt.s32.totalorder %s1502, 3
        %s1504 = scalar_select %p1503, %s1502, 3
        %s1505 = smul.addr %s1504, 4
        %s1506 = scalar_lea.vmem %s13, %s1505
      $region84: #{autoencoder_classifier.1} parent=79 // pred_fallthru
        _
    $region80: #{autoencoder_classifier.1} parent=5 // pred_fallthru
      _
  $region6: #{autoencoder_classifier.1} parent=0 // loop_footer
    %s23 = sadd.s32 1, %s19
  $region7: #{autoencoder_classifier.1} parent=0 // loop_footer_branch
    %18 = sbr.rel target = $region3
  $region8: #{autoencoder_classifier.1} parent=0 // loop_exit
    _

</llo_original>
